<compile_context>
chip_gen: v6e
topology: v6e:2x2x1
jax: 0.10.0
libtpu: 0.0.40
codegen_flags: <defaults>
</compile_context>

<pallas_src>
import numpy as np

import jax
import jax.numpy as jnp
from jax import lax
from jax.experimental import pallas as pl
from jax.experimental.pallas import tpu as pltpu


# ---------------------------------------------------------------------------
# Static model dimensions
# ---------------------------------------------------------------------------
H = W = 16                    # input spatial size (single channel)
CIN = 1
C1 = 8                        # conv1 out channels -> W  * C1 = 128 lanes
C2 = 16                       # conv2 out channels -> W1 * C2 = 128 lanes
H1, W1 = H // 2, W // 2       # 8, 8 after pool1
H2, W2 = H1 // 2, W1 // 2     # 4, 4 after pool2
FEAT = H2 * W2 * C2           # 256
EMB = 32

MAX_TILE = 64                 # images per grid step (multiple of 8)


def _pick_tile(n):
    """Batch-tile size: multiple of 8 (so 16*B sublanes is a multiple of 128),
    capped at MAX_TILE.  For n > MAX_TILE the grid has >= 2 steps, which lets
    the 'parallel' axis shard across v7x's two TensorCores."""
    return max(8, min(MAX_TILE, ((n + 7) // 8) * 8))


# ---------------------------------------------------------------------------
# In-kernel building blocks (all matmuls: bf16 operands, f32 accumulation)
# ---------------------------------------------------------------------------
def _mm(a, w):
    return jnp.dot(a.astype(jnp.bfloat16), w.astype(jnp.bfloat16),
                   preferred_element_type=jnp.float32)


def _conv3(x, b, hc, w_ref, bias_ref):
    """3x3 'same' conv + bias + ReLU on a batch-stacked activation.

    x: (hc*b, K) with row = h*b + batch; lanes pack (w_in, c_in).
    w_ref: (3, K, 128) dh-indexed weight slabs (dw taps, zero padding and the
    lane-dense (w_out, c_out) packing folded in host-side).
    The dh shift is a sublane shift: pad the row axis with b zero rows on each
    side (in h-major layout a whole-array shift of b rows stays inside each
    image) and take three tile-aligned static slices -> 3 MXU matmuls.
    """
    x = x.astype(jnp.bfloat16)
    k = x.shape[-1]
    zpad = jnp.zeros((b, k), dtype=x.dtype)
    xp = jnp.concatenate([zpad, x, zpad], axis=0)           # ((hc+2)*b, K)
    y = _mm(xp[: hc * b], w_ref[0])                         # x[h-1]
    y = y + _mm(xp[b:(hc + 1) * b], w_ref[1])               # x[h]
    y = y + _mm(xp[2 * b:(hc + 2) * b], w_ref[2])           # x[h+1]
    return jnp.maximum(y + bias_ref[...], 0.0)              # (hc*b, 128) f32


def _pool2x2(a, b, hc, pc_ref):
    """2x2 max-pool.  h direction: tile-aligned reshape + elementwise max
    (rows are h*b + batch and b is a multiple of 8, so all reshapes stay on
    (8,128) tile boundaries).  w direction (lanes packed (w, c)): two resident
    0/1 selection matmuls."""
    l = a.shape[-1]
    a4 = a.reshape(hc // 2, 2, b, l)
    r = jnp.maximum(a4[:, 0], a4[:, 1]).reshape((hc // 2) * b, l)
    return jnp.maximum(_mm(r, pc_ref[0]), _mm(r, pc_ref[1]))   # (hc//2*b, l//2)


def _embed_tile(x_ref, w1_ref, b1_ref, w2_ref, b2_ref, w3_ref, b3_ref,
                pc1_ref, pc2_ref):
    """Embed one tile of b images entirely in VMEM/registers -> (b, 32) f32."""
    b = x_ref.shape[1]
    x2 = x_ref[...].reshape(H * b, W)               # rows h*b + batch, lanes w
    a1 = _conv3(x2, b, H, w1_ref, b1_ref)           # (16b, 128): lanes w*8+c
    p1 = _pool2x2(a1, b, H, pc1_ref)                # (8b, 64)
    a2 = _conv3(p1, b, H1, w2_ref, b2_ref)          # (8b, 128): lanes w*16+c
    p2 = _pool2x2(a2, b, H1, pc2_ref)               # (4b, 64)
    # fc: ONE matmul; output lanes pack (h, emb) = 4*32 = 128; the per-image
    # sum over the 4 h rows then picks the matching 32-lane block per h.
    t = _mm(p2, w3_ref[...])                        # (4b, 128)
    t3 = t.reshape(H2, b, H2 * EMB)
    emb = (b3_ref[...]
           + t3[0][:, 0:EMB] + t3[1][:, EMB:2 * EMB]
           + t3[2][:, 2 * EMB:3 * EMB] + t3[3][:, 3 * EMB:4 * EMB])
    return emb                                       # (b, 32) f32


def _embed_kernel(x_ref, w1_ref, b1_ref, w2_ref, b2_ref, w3_ref, b3_ref,
                  pc1_ref, pc2_ref, emb_ref):
    emb_ref[...] = _embed_tile(x_ref, w1_ref, b1_ref, w2_ref, b2_ref,
                               w3_ref, b3_ref, pc1_ref, pc2_ref)


def _rank_kernel(x_ref, w1_ref, b1_ref, w2_ref, b2_ref, w3_ref, b3_ref,
                 pc1_ref, pc2_ref, refs_t_ref, refsq_ref, dist_ref):
    emb = _embed_tile(x_ref, w1_ref, b1_ref, w2_ref, b2_ref,
                      w3_ref, b3_ref, pc1_ref, pc2_ref)      # (b, 32) f32
    # ||emb - ref||_2 with refs on the lane axis (lane-dense output):
    # Gram-matrix form in full f32, squared distance clamped at 0 before sqrt.
    g = jnp.dot(emb, refs_t_ref[...], preferred_element_type=jnp.float32)
    en = jnp.sum(emb * emb, axis=-1, keepdims=True)          # (b, 1)
    d2 = jnp.maximum(en + refsq_ref[...] - 2.0 * g, 0.0)     # (b, R)
    dist_ref[...] = jnp.sqrt(d2)


# ---------------------------------------------------------------------------
# pallas_call wrappers
# ---------------------------------------------------------------------------
def _weight_specs():
    z3 = lambda i: (0, 0, 0)
    z2 = lambda i: (0, 0)
    return [
        pl.BlockSpec((3, W, W * C1), z3),          # w1big   (3, 16, 128) bf16
        pl.BlockSpec((1, W * C1), z2),             # b1big   (1, 128)     f32
        pl.BlockSpec((3, W1 * C1, W1 * C2), z3),   # w2big   (3, 64, 128) bf16
        pl.BlockSpec((1, W1 * C2), z2),            # b2big   (1, 128)     f32
        pl.BlockSpec((W2 * C2, H2 * EMB), z2),     # w3wide  (64, 128)    bf16
        pl.BlockSpec((1, EMB), z2),                # b3      (1, 32)      f32
        pl.BlockSpec((2, W * C1, W1 * C1), z3),    # pc1     (2, 128, 64) bf16
        pl.BlockSpec((2, W1 * C2, W2 * C2), z3),   # pc2     (2, 128, 64) bf16
    ]


def _prep_images(x_nchw, bt):
    """(n,1,H,W) -> (H, n_pad, W) h-major layout, zero-padded to a tile multiple."""
    x = x_nchw.astype(jnp.float32)
    n = x.shape[0]
    n_pad = -(-n // bt) * bt
    xi = x.reshape(n, H, W)
    if n_pad > n:
        xi = jnp.pad(xi, ((0, n_pad - n), (0, 0), (0, 0)))
    return jnp.transpose(xi, (1, 0, 2)), n, n_pad              # (H, n_pad, W)


@jax.jit
def triplet_forward(params, x_nchw):
    """TripletModel.forward(x) == self.embedding_model(x)."""
    bt = _pick_tile(x_nchw.shape[0])
    x3, n, n_pad = _prep_images(x_nchw, bt)
    emb = pl.pallas_call(
        _embed_kernel,
        out_shape=jax.ShapeDtypeStruct((n_pad, EMB), jnp.float32),
        grid=(n_pad // bt,),
        in_specs=[pl.BlockSpec((H, bt, W), lambda i: (0, i, 0))] + _weight_specs(),
        out_specs=pl.BlockSpec((bt, EMB), lambda i: (i, 0)),
        compiler_params=pltpu.CompilerParams(
            dimension_semantics=("parallel",)),
    )(x3, params["w1big"], params["b1big"], params["w2big"], params["b2big"],
      params["w3wide"], params["b3"], params["pc1"], params["pc2"])
    return emb[:n]


@jax.jit
def rank_countries(params, ref_embeddings, drawings_nchw):
    """rank_countries hot path: embed drawings + L2 distance to each reference
    embedding, fused.  Returns (num_refs, batch) like the torch code."""
    bt = _pick_tile(drawings_nchw.shape[0])
    x3, n, n_pad = _prep_images(drawings_nchw, bt)
    refs = ref_embeddings.astype(jnp.float32)
    r = refs.shape[0]
    refs_t = jnp.transpose(refs)                               # (32, R), resident
    refsq = jnp.sum(refs * refs, axis=-1)[None, :]             # (1, R), resident
    dist = pl.pallas_call(
        _rank_kernel,
        out_shape=jax.ShapeDtypeStruct((n_pad, r), jnp.float32),
        grid=(n_pad // bt,),
        in_specs=([pl.BlockSpec((H, bt, W), lambda i: (0, i, 0))]
                  + _weight_specs()
                  + [pl.BlockSpec((EMB, r), lambda i: (0, 0)),
                     pl.BlockSpec((1, r), lambda i: (0, 0))]),
        out_specs=pl.BlockSpec((bt, r), lambda i: (i, 0)),
        compiler_params=pltpu.CompilerParams(
            dimension_semantics=("parallel",)),
    )(x3, params["w1big"], params["b1big"], params["w2big"], params["b2big"],
      params["w3wide"], params["b3"], params["pc1"], params["pc2"],
      refs_t, refsq)
    return jnp.transpose(dist[:n])                             # (num_refs, batch)


# ---------------------------------------------------------------------------
# Parameters: PyTorch-layout weights -> shift-folded, lane-dense kernel slabs
# ---------------------------------------------------------------------------
def pack_params(w1, b1, w2, b2, w3, b3, w3_rows="hwc"):
    """One-time host-side repack.  Folds the 3x3 dw taps and width zero-padding
    into dh-indexed slabs whose output columns are the lane-dense (w, c)
    packing; precomputes the 2x lane-pool selection matrices; repacks w3 into
    the (w,c)-by-(h,emb) form used by the single fc matmul.

    w3_rows: "hwc" if w3 rows are already ordered (h, w, c) (our init / the
    reference below).  Use "chw" when loading a real PyTorch nn.Linear that
    follows a flatten of NCHW activations (rows ordered (c, h, w))."""
    w1 = np.asarray(w1, np.float32)
    b1 = np.asarray(b1, np.float32)
    w2 = np.asarray(w2, np.float32)
    b2 = np.asarray(b2, np.float32)
    w3 = np.asarray(w3, np.float32)
    b3 = np.asarray(b3, np.float32)

    if w3_rows == "chw":            # PyTorch flatten order -> (h, w, c) order
        w3 = w3.reshape(C2, H2, W2, EMB).transpose(1, 2, 0, 3).reshape(FEAT, EMB)

    # conv1 slabs: w1big[dh, w_in, w_out*C1 + co] = w1[co, 0, dh, w_in - w_out + 1]
    w1big = np.zeros((3, W, W * C1), np.float32)
    for dh in range(3):
        for w_out in range(W):
            for dw in range(3):
                w_in = w_out + dw - 1
                if 0 <= w_in < W:
                    w1big[dh, w_in, w_out * C1:(w_out + 1) * C1] = w1[:, 0, dh, dw]

    # conv2 slabs: w2big[dh, w_in*C1 + ci, w_out*C2 + co] = w2[co, ci, dh, w_in - w_out + 1]
    w2big = np.zeros((3, W1 * C1, W1 * C2), np.float32)
    for dh in range(3):
        for w_out in range(W1):
            for dw in range(3):
                w_in = w_out + dw - 1
                if 0 <= w_in < W1:
                    w2big[dh, w_in * C1:(w_in + 1) * C1,
                          w_out * C2:(w_out + 1) * C2] = w2[:, :, dh, dw].T

    # fc: w3wide[w*16+c, h*32+e] = w3[h*64 + w*16 + c, e]
    w3wide = w3.reshape(H2, W2 * C2, EMB).transpose(1, 0, 2).reshape(W2 * C2, H2 * EMB)

    # Lane-pool 0/1 selectors over lane-packed (w, c) columns (resident in VMEM).
    def col_sel(n_in, n_out, nch, parity):
        i = np.arange(n_in)[:, None]
        j = np.arange(n_out)[None, :]
        return ((i % nch == j % nch) &
                (i // nch == 2 * (j // nch) + parity)).astype(np.float32)

    pc1 = np.stack([col_sel(W * C1, W1 * C1, C1, 0), col_sel(W * C1, W1 * C1, C1, 1)])
    pc2 = np.stack([col_sel(W1 * C2, W2 * C2, C2, 0), col_sel(W1 * C2, W2 * C2, C2, 1)])

    bf = jnp.bfloat16
    return {
        "w1big": jnp.asarray(w1big, bf),
        "b1big": jnp.asarray(np.tile(b1, W).reshape(1, W * C1), jnp.float32),
        "w2big": jnp.asarray(w2big, bf),
        "b2big": jnp.asarray(np.tile(b2, W1).reshape(1, W1 * C2), jnp.float32),
        "w3wide": jnp.asarray(w3wide, bf),
        "b3": jnp.asarray(b3.reshape(1, EMB), jnp.float32),
        "pc1": jnp.asarray(pc1, bf),
        "pc2": jnp.asarray(pc2, bf),
    }


def init_params(key):
    k1, k2, k3, k4, k5, k6 = jax.random.split(key, 6)
    w1 = jax.random.normal(k1, (C1, CIN, 3, 3), jnp.float32) * 0.2
    b1 = jax.random.normal(k2, (C1,), jnp.float32) * 0.02
    w2 = jax.random.normal(k3, (C2, C1, 3, 3), jnp.float32) * 0.1
    b2 = jax.random.normal(k4, (C2,), jnp.float32) * 0.02
    w3 = jax.random.normal(k5, (FEAT, EMB), jnp.float32) * 0.05   # rows (h, w, c)
    b3 = jax.random.normal(k6, (EMB,), jnp.float32) * 0.02
    raw = (w1, b1, w2, b2, w3, b3)
    return pack_params(*raw), raw


# ---------------------------------------------------------------------------
# Pure-JAX (XLA) reference of the same embedder, for a numerical sanity check
# ---------------------------------------------------------------------------
def reference_forward(raw, x_nchw):
    w1, b1, w2, b2, w3, b3 = raw
    hi = lax.Precision.HIGHEST
    y = lax.conv_general_dilated(x_nchw, w1, (1, 1), "SAME",
                                 dimension_numbers=("NCHW", "OIHW", "NCHW"),
                                 precision=hi)
    y = jnp.maximum(y + b1[None, :, None, None], 0.0)
    y = lax.reduce_window(y, -jnp.inf, lax.max, (1, 1, 2, 2), (1, 1, 2, 2), "VALID")
    y = lax.conv_general_dilated(y, w2, (1, 1), "SAME",
                                 dimension_numbers=("NCHW", "OIHW", "NCHW"),
                                 precision=hi)
    y = jnp.maximum(y + b2[None, :, None, None], 0.0)
    y = lax.reduce_window(y, -jnp.inf, lax.max, (1, 1, 2, 2), (1, 1, 2, 2), "VALID")
    feat = jnp.transpose(y, (0, 2, 3, 1)).reshape(x_nchw.shape[0], -1)  # (h, w, c)
    return jnp.dot(feat, w3, precision=hi) + b3[None, :]


# ---------------------------------------------------------------------------
if __name__ == "__main__":
    key = jax.random.PRNGKey(0)
    pkey, xkey, rkey = jax.random.split(key, 3)
    params, raw = init_params(pkey)

    # Batch of 2 single-channel 16x16 "drawings", NCHW as in the PyTorch model.
    x = jax.random.uniform(xkey, (2, 1, 16, 16), jnp.float32)

    emb = jax.block_until_ready(triplet_forward(params, x))
    assert emb.shape == (2, EMB) and emb.dtype == jnp.float32

    # Numerical sanity vs the f32 XLA reference (kernel matmuls use bf16
    # operands with f32 accumulation, hence the loose tolerance).
    emb_ref = jax.block_until_ready(reference_forward(raw, x))
    err = float(jnp.max(jnp.abs(emb - emb_ref)))
    assert err < 5e-2, f"embedding mismatch vs reference: {err}"

    # load_reference analog: embed deterministic reference "country images".
    # TODO(synk): geom_to_img rasterization + country-name dict are host-side
    # glue with no Pallas equivalent; reference images are synthesized here.
    ref_imgs = (jax.random.uniform(rkey, (3, 1, 16, 16), jnp.float32) > 0.5
                ).astype(jnp.float32)
    ref_emb = jax.block_until_ready(triplet_forward(params, ref_imgs))

    dists = jax.block_until_ready(rank_countries(params, ref_emb, x))
    assert dists.shape == (3, 2)

    dists_check = jnp.sqrt(
        jnp.sum((ref_emb[:, None, :] - emb[None, :, :]) ** 2, axis=-1))
    err_d = float(jnp.max(jnp.abs(dists - dists_check)))
    assert err_d < 1e-3, f"distance mismatch vs reference: {err_d}"

    print("KERNEL_OK")
</pallas_src>

<mosaic_0001>
module attributes {stable_mosaic.version = 11 : i64} {
  func.func @_embed_kernel(%arg0: i32, %arg1: memref<16x8x16xf32, #tpu.memory_space<vmem>>, %arg2: memref<3x16x128xbf16, #tpu.memory_space<vmem>>, %arg3: memref<1x128xf32, #tpu.memory_space<vmem>>, %arg4: memref<3x64x128xbf16, #tpu.memory_space<vmem>>, %arg5: memref<1x128xf32, #tpu.memory_space<vmem>>, %arg6: memref<64x128xbf16, #tpu.memory_space<vmem>>, %arg7: memref<1x32xf32, #tpu.memory_space<vmem>>, %arg8: memref<2x128x64xbf16, #tpu.memory_space<vmem>>, %arg9: memref<2x128x64xbf16, #tpu.memory_space<vmem>>, %arg10: memref<8x32xf32, #tpu.memory_space<vmem>>) attributes {dimension_semantics = [#tpu.dimension_semantics<parallel>], iteration_bounds = array<i64: 1>, scalar_prefetch = 0 : i64, scratch_operands = 0 : i64, tpu.core_type = #tpu.core_type<tc>, window_params = [{transform_indices = @transform_0, window_bounds = array<i64: 16, 8, 16>}, {pipeline_mode = #tpu.pipeline_mode<synchronous>, transform_indices = @transform_1, window_bounds = array<i64: 3, 16, 128>}, {pipeline_mode = #tpu.pipeline_mode<synchronous>, transform_indices = @transform_2, window_bounds = array<i64: 1, 128>}, {pipeline_mode = #tpu.pipeline_mode<synchronous>, transform_indices = @transform_3, window_bounds = array<i64: 3, 64, 128>}, {pipeline_mode = #tpu.pipeline_mode<synchronous>, transform_indices = @transform_4, window_bounds = array<i64: 1, 128>}, {pipeline_mode = #tpu.pipeline_mode<synchronous>, transform_indices = @transform_5, window_bounds = array<i64: 64, 128>}, {pipeline_mode = #tpu.pipeline_mode<synchronous>, transform_indices = @transform_6, window_bounds = array<i64: 1, 32>}, {pipeline_mode = #tpu.pipeline_mode<synchronous>, transform_indices = @transform_7, window_bounds = array<i64: 2, 128, 64>}, {pipeline_mode = #tpu.pipeline_mode<synchronous>, transform_indices = @transform_8, window_bounds = array<i64: 2, 128, 64>}, {transform_indices = @transform_9, window_bounds = array<i64: 8, 32>}]} {
    %c0 = arith.constant 0 : index
    %c0_0 = arith.constant 0 : index
    %c0_1 = arith.constant 0 : index
    %0 = vector.load %arg1[%c0, %c0_0, %c0_1] : memref<16x8x16xf32, #tpu.memory_space<vmem>>, vector<16x8x16xf32>
    %1 = vector.shape_cast %0 : vector<16x8x16xf32> to vector<128x16xf32>
    %2 = arith.truncf %1 : vector<128x16xf32> to vector<128x16xbf16>
    %cst = arith.constant 0.000000e+00 : bf16
    %3 = vector.broadcast %cst : bf16 to vector<8x16xbf16>
    %4 = tpu.concatenate %3, %2, %3 in 0 : vector<8x16xbf16>, vector<128x16xbf16>, vector<8x16xbf16> -> vector<144x16xbf16>
    %5 = vector.extract_strided_slice %4 {offsets = [0, 0], sizes = [128, 16], strides = [1, 1]} : vector<144x16xbf16> to vector<128x16xbf16>
    %c0_2 = arith.constant 0 : index
    %c0_3 = arith.constant 0 : index
    %c0_4 = arith.constant 0 : index
    %6 = vector.load %arg2[%c0_2, %c0_3, %c0_4] : memref<3x16x128xbf16, #tpu.memory_space<vmem>>, vector<1x16x128xbf16>
    %7 = vector.shape_cast %6 : vector<1x16x128xbf16> to vector<16x128xbf16>
    %cst_5 = arith.constant dense<0.000000e+00> : vector<128x128xf32>
    %8 = tpu.matmul %5, %7, %cst_5 {dimension_numbers = #tpu.dot_dimension_numbers<[1], [0], [0], [1], [0, 0, 1, 1], [], []>} : vector<128x16xbf16>, vector<16x128xbf16>, vector<128x128xf32> -> vector<128x128xf32>
    %9 = vector.extract_strided_slice %4 {offsets = [8, 0], sizes = [128, 16], strides = [1, 1]} : vector<144x16xbf16> to vector<128x16xbf16>
    %c1 = arith.constant 1 : index
    %c0_6 = arith.constant 0 : index
    %c0_7 = arith.constant 0 : index
    %10 = vector.load %arg2[%c1, %c0_6, %c0_7] : memref<3x16x128xbf16, #tpu.memory_space<vmem>>, vector<1x16x128xbf16>
    %11 = vector.shape_cast %10 : vector<1x16x128xbf16> to vector<16x128xbf16>
    %cst_8 = arith.constant dense<0.000000e+00> : vector<128x128xf32>
    %12 = tpu.matmul %9, %11, %cst_8 {dimension_numbers = #tpu.dot_dimension_numbers<[1], [0], [0], [1], [0, 0, 1, 1], [], []>} : vector<128x16xbf16>, vector<16x128xbf16>, vector<128x128xf32> -> vector<128x128xf32>
    %13 = arith.addf %8, %12 : vector<128x128xf32>
    %14 = vector.extract_strided_slice %4 {offsets = [16, 0], sizes = [128, 16], strides = [1, 1]} : vector<144x16xbf16> to vector<128x16xbf16>
    %c2 = arith.constant 2 : index
    %c0_9 = arith.constant 0 : index
    %c0_10 = arith.constant 0 : index
    %15 = vector.load %arg2[%c2, %c0_9, %c0_10] : memref<3x16x128xbf16, #tpu.memory_space<vmem>>, vector<1x16x128xbf16>
    %16 = vector.shape_cast %15 : vector<1x16x128xbf16> to vector<16x128xbf16>
    %cst_11 = arith.constant dense<0.000000e+00> : vector<128x128xf32>
    %17 = tpu.matmul %14, %16, %cst_11 {dimension_numbers = #tpu.dot_dimension_numbers<[1], [0], [0], [1], [0, 0, 1, 1], [], []>} : vector<128x16xbf16>, vector<16x128xbf16>, vector<128x128xf32> -> vector<128x128xf32>
    %18 = arith.addf %13, %17 : vector<128x128xf32>
    %c0_12 = arith.constant 0 : index
    %c0_13 = arith.constant 0 : index
    %19 = vector.load %arg3[%c0_12, %c0_13] : memref<1x128xf32, #tpu.memory_space<vmem>>, vector<1x128xf32>
    %20 = vector.broadcast %19 : vector<1x128xf32> to vector<128x128xf32>
    %21 = arith.addf %18, %20 : vector<128x128xf32>
    %cst_14 = arith.constant 0.000000e+00 : f32
    %22 = vector.broadcast %cst_14 : f32 to vector<128x128xf32>
    %23 = arith.maximumf %21, %22 : vector<128x128xf32>
    %24 = vector.shape_cast %23 : vector<128x128xf32> to vector<8x2x8x128xf32>
    %25 = vector.extract_strided_slice %24 {offsets = [0, 0, 0, 0], sizes = [8, 1, 8, 128], strides = [1, 1, 1, 1]} : vector<8x2x8x128xf32> to vector<8x1x8x128xf32>
    %26 = vector.shape_cast %25 : vector<8x1x8x128xf32> to vector<8x8x128xf32>
    %27 = vector.extract_strided_slice %24 {offsets = [0, 1, 0, 0], sizes = [8, 1, 8, 128], strides = [1, 1, 1, 1]} : vector<8x2x8x128xf32> to vector<8x1x8x128xf32>
    %28 = vector.shape_cast %27 : vector<8x1x8x128xf32> to vector<8x8x128xf32>
    %29 = arith.maximumf %26, %28 : vector<8x8x128xf32>
    %30 = vector.shape_cast %29 : vector<8x8x128xf32> to vector<64x128xf32>
    %c0_15 = arith.constant 0 : index
    %c0_16 = arith.constant 0 : index
    %c0_17 = arith.constant 0 : index
    %31 = vector.load %arg8[%c0_15, %c0_16, %c0_17] : memref<2x128x64xbf16, #tpu.memory_space<vmem>>, vector<1x128x64xbf16>
    %32 = vector.shape_cast %31 : vector<1x128x64xbf16> to vector<128x64xbf16>
    %33 = arith.truncf %30 : vector<64x128xf32> to vector<64x128xbf16>
    %cst_18 = arith.constant dense<0.000000e+00> : vector<64x64xf32>
    %34 = tpu.matmul %33, %32, %cst_18 {dimension_numbers = #tpu.dot_dimension_numbers<[1], [0], [0], [1], [0, 0, 1, 1], [], []>} : vector<64x128xbf16>, vector<128x64xbf16>, vector<64x64xf32> -> vector<64x64xf32>
    %c1_19 = arith.constant 1 : index
    %c0_20 = arith.constant 0 : index
    %c0_21 = arith.constant 0 : index
    %35 = vector.load %arg8[%c1_19, %c0_20, %c0_21] : memref<2x128x64xbf16, #tpu.memory_space<vmem>>, vector<1x128x64xbf16>
    %36 = vector.shape_cast %35 : vector<1x128x64xbf16> to vector<128x64xbf16>
    %37 = arith.truncf %30 : vector<64x128xf32> to vector<64x128xbf16>
    %cst_22 = arith.constant dense<0.000000e+00> : vector<64x64xf32>
    %38 = tpu.matmul %37, %36, %cst_22 {dimension_numbers = #tpu.dot_dimension_numbers<[1], [0], [0], [1], [0, 0, 1, 1], [], []>} : vector<64x128xbf16>, vector<128x64xbf16>, vector<64x64xf32> -> vector<64x64xf32>
    %39 = arith.maximumf %34, %38 : vector<64x64xf32>
    %40 = arith.truncf %39 : vector<64x64xf32> to vector<64x64xbf16>
    %cst_23 = arith.constant 0.000000e+00 : bf16
    %41 = vector.broadcast %cst_23 : bf16 to vector<8x64xbf16>
    %42 = tpu.concatenate %41, %40, %41 in 0 : vector<8x64xbf16>, vector<64x64xbf16>, vector<8x64xbf16> -> vector<80x64xbf16>
    %43 = vector.extract_strided_slice %42 {offsets = [0, 0], sizes = [64, 64], strides = [1, 1]} : vector<80x64xbf16> to vector<64x64xbf16>
    %c0_24 = arith.constant 0 : index
    %c0_25 = arith.constant 0 : index
    %c0_26 = arith.constant 0 : index
    %44 = vector.load %arg4[%c0_24, %c0_25, %c0_26] : memref<3x64x128xbf16, #tpu.memory_space<vmem>>, vector<1x64x128xbf16>
    %45 = vector.shape_cast %44 : vector<1x64x128xbf16> to vector<64x128xbf16>
    %cst_27 = arith.constant dense<0.000000e+00> : vector<64x128xf32>
    %46 = tpu.matmul %43, %45, %cst_27 {dimension_numbers = #tpu.dot_dimension_numbers<[1], [0], [0], [1], [0, 0, 1, 1], [], []>} : vector<64x64xbf16>, vector<64x128xbf16>, vector<64x128xf32> -> vector<64x128xf32>
    %47 = vector.extract_strided_slice %42 {offsets = [8, 0], sizes = [64, 64], strides = [1, 1]} : vector<80x64xbf16> to vector<64x64xbf16>
    %c1_28 = arith.constant 1 : index
    %c0_29 = arith.constant 0 : index
    %c0_30 = arith.constant 0 : index
    %48 = vector.load %arg4[%c1_28, %c0_29, %c0_30] : memref<3x64x128xbf16, #tpu.memory_space<vmem>>, vector<1x64x128xbf16>
    %49 = vector.shape_cast %48 : vector<1x64x128xbf16> to vector<64x128xbf16>
    %cst_31 = arith.constant dense<0.000000e+00> : vector<64x128xf32>
    %50 = tpu.matmul %47, %49, %cst_31 {dimension_numbers = #tpu.dot_dimension_numbers<[1], [0], [0], [1], [0, 0, 1, 1], [], []>} : vector<64x64xbf16>, vector<64x128xbf16>, vector<64x128xf32> -> vector<64x128xf32>
    %51 = arith.addf %46, %50 : vector<64x128xf32>
    %52 = vector.extract_strided_slice %42 {offsets = [16, 0], sizes = [64, 64], strides = [1, 1]} : vector<80x64xbf16> to vector<64x64xbf16>
    %c2_32 = arith.constant 2 : index
    %c0_33 = arith.constant 0 : index
    %c0_34 = arith.constant 0 : index
    %53 = vector.load %arg4[%c2_32, %c0_33, %c0_34] : memref<3x64x128xbf16, #tpu.memory_space<vmem>>, vector<1x64x128xbf16>
    %54 = vector.shape_cast %53 : vector<1x64x128xbf16> to vector<64x128xbf16>
    %cst_35 = arith.constant dense<0.000000e+00> : vector<64x128xf32>
    %55 = tpu.matmul %52, %54, %cst_35 {dimension_numbers = #tpu.dot_dimension_numbers<[1], [0], [0], [1], [0, 0, 1, 1], [], []>} : vector<64x64xbf16>, vector<64x128xbf16>, vector<64x128xf32> -> vector<64x128xf32>
    %56 = arith.addf %51, %55 : vector<64x128xf32>
    %c0_36 = arith.constant 0 : index
    %c0_37 = arith.constant 0 : index
    %57 = vector.load %arg5[%c0_36, %c0_37] : memref<1x128xf32, #tpu.memory_space<vmem>>, vector<1x128xf32>
    %58 = vector.broadcast %57 : vector<1x128xf32> to vector<64x128xf32>
    %59 = arith.addf %56, %58 : vector<64x128xf32>
    %cst_38 = arith.constant 0.000000e+00 : f32
    %60 = vector.broadcast %cst_38 : f32 to vector<64x128xf32>
    %61 = arith.maximumf %59, %60 : vector<64x128xf32>
    %62 = vector.shape_cast %61 : vector<64x128xf32> to vector<4x2x8x128xf32>
    %63 = vector.extract_strided_slice %62 {offsets = [0, 0, 0, 0], sizes = [4, 1, 8, 128], strides = [1, 1, 1, 1]} : vector<4x2x8x128xf32> to vector<4x1x8x128xf32>
    %64 = vector.shape_cast %63 : vector<4x1x8x128xf32> to vector<4x8x128xf32>
    %65 = vector.extract_strided_slice %62 {offsets = [0, 1, 0, 0], sizes = [4, 1, 8, 128], strides = [1, 1, 1, 1]} : vector<4x2x8x128xf32> to vector<4x1x8x128xf32>
    %66 = vector.shape_cast %65 : vector<4x1x8x128xf32> to vector<4x8x128xf32>
    %67 = arith.maximumf %64, %66 : vector<4x8x128xf32>
    %68 = vector.shape_cast %67 : vector<4x8x128xf32> to vector<32x128xf32>
    %c0_39 = arith.constant 0 : index
    %c0_40 = arith.constant 0 : index
    %c0_41 = arith.constant 0 : index
    %69 = vector.load %arg9[%c0_39, %c0_40, %c0_41] : memref<2x128x64xbf16, #tpu.memory_space<vmem>>, vector<1x128x64xbf16>
    %70 = vector.shape_cast %69 : vector<1x128x64xbf16> to vector<128x64xbf16>
    %71 = arith.truncf %68 : vector<32x128xf32> to vector<32x128xbf16>
    %cst_42 = arith.constant dense<0.000000e+00> : vector<32x64xf32>
    %72 = tpu.matmul %71, %70, %cst_42 {dimension_numbers = #tpu.dot_dimension_numbers<[1], [0], [0], [1], [0, 0, 1, 1], [], []>} : vector<32x128xbf16>, vector<128x64xbf16>, vector<32x64xf32> -> vector<32x64xf32>
    %c1_43 = arith.constant 1 : index
    %c0_44 = arith.constant 0 : index
    %c0_45 = arith.constant 0 : index
    %73 = vector.load %arg9[%c1_43, %c0_44, %c0_45] : memref<2x128x64xbf16, #tpu.memory_space<vmem>>, vector<1x128x64xbf16>
    %74 = vector.shape_cast %73 : vector<1x128x64xbf16> to vector<128x64xbf16>
    %75 = arith.truncf %68 : vector<32x128xf32> to vector<32x128xbf16>
    %cst_46 = arith.constant dense<0.000000e+00> : vector<32x64xf32>
    %76 = tpu.matmul %75, %74, %cst_46 {dimension_numbers = #tpu.dot_dimension_numbers<[1], [0], [0], [1], [0, 0, 1, 1], [], []>} : vector<32x128xbf16>, vector<128x64xbf16>, vector<32x64xf32> -> vector<32x64xf32>
    %77 = arith.maximumf %72, %76 : vector<32x64xf32>
    %c0_47 = arith.constant 0 : index
    %c0_48 = arith.constant 0 : index
    %78 = vector.load %arg6[%c0_47, %c0_48] : memref<64x128xbf16, #tpu.memory_space<vmem>>, vector<64x128xbf16>
    %79 = arith.truncf %77 : vector<32x64xf32> to vector<32x64xbf16>
    %cst_49 = arith.constant dense<0.000000e+00> : vector<32x128xf32>
    %80 = tpu.matmul %79, %78, %cst_49 {dimension_numbers = #tpu.dot_dimension_numbers<[1], [0], [0], [1], [0, 0, 1, 1], [], []>} : vector<32x64xbf16>, vector<64x128xbf16>, vector<32x128xf32> -> vector<32x128xf32>
    %81 = vector.shape_cast %80 : vector<32x128xf32> to vector<4x8x128xf32>
    %c0_50 = arith.constant 0 : index
    %c0_51 = arith.constant 0 : index
    %82 = vector.load %arg7[%c0_50, %c0_51] : memref<1x32xf32, #tpu.memory_space<vmem>>, vector<1x32xf32>
    %83 = vector.extract_strided_slice %81 {offsets = [0, 0, 0], sizes = [1, 8, 128], strides = [1, 1, 1]} : vector<4x8x128xf32> to vector<1x8x128xf32>
    %84 = vector.shape_cast %83 : vector<1x8x128xf32> to vector<8x128xf32>
    %85 = vector.extract_strided_slice %84 {offsets = [0, 0], sizes = [8, 32], strides = [1, 1]} : vector<8x128xf32> to vector<8x32xf32>
    %86 = vector.broadcast %82 : vector<1x32xf32> to vector<8x32xf32>
    %87 = arith.addf %86, %85 : vector<8x32xf32>
    %88 = vector.extract_strided_slice %81 {offsets = [1, 0, 0], sizes = [1, 8, 128], strides = [1, 1, 1]} : vector<4x8x128xf32> to vector<1x8x128xf32>
    %89 = vector.shape_cast %88 : vector<1x8x128xf32> to vector<8x128xf32>
    %90 = vector.extract_strided_slice %89 {offsets = [0, 32], sizes = [8, 32], strides = [1, 1]} : vector<8x128xf32> to vector<8x32xf32>
    %91 = arith.addf %87, %90 : vector<8x32xf32>
    %92 = vector.extract_strided_slice %81 {offsets = [2, 0, 0], sizes = [1, 8, 128], strides = [1, 1, 1]} : vector<4x8x128xf32> to vector<1x8x128xf32>
    %93 = vector.shape_cast %92 : vector<1x8x128xf32> to vector<8x128xf32>
    %94 = vector.extract_strided_slice %93 {offsets = [0, 64], sizes = [8, 32], strides = [1, 1]} : vector<8x128xf32> to vector<8x32xf32>
    %95 = arith.addf %91, %94 : vector<8x32xf32>
    %96 = vector.extract_strided_slice %81 {offsets = [3, 0, 0], sizes = [1, 8, 128], strides = [1, 1, 1]} : vector<4x8x128xf32> to vector<1x8x128xf32>
    %97 = vector.shape_cast %96 : vector<1x8x128xf32> to vector<8x128xf32>
    %98 = vector.extract_strided_slice %97 {offsets = [0, 96], sizes = [8, 32], strides = [1, 1]} : vector<8x128xf32> to vector<8x32xf32>
    %99 = arith.addf %95, %98 : vector<8x32xf32>
    %c0_52 = arith.constant 0 : index
    %c0_53 = arith.constant 0 : index
    %100 = vector.load %arg10[%c0_52, %c0_53] : memref<8x32xf32, #tpu.memory_space<vmem>>, vector<8x32xf32>
    tpu.vector_store %arg10[%c0_52, %c0_53], %99 {strides = array<i32>} : memref<8x32xf32, #tpu.memory_space<vmem>>, vector<8x32xf32>,
    return
  }
  func.func @transform_0(%arg0: i32) -> (i32, i32, i32) {
    %c0_i32 = arith.constant 0 : i32
    %c0_i32_0 = arith.constant 0 : i32
    %c0_i32_1 = arith.constant 0 : i32
    return %c0_i32, %arg0, %c0_i32_0 : i32, i32, i32
  }
  func.func @transform_1(%arg0: i32) -> (i32, i32, i32) {
    %c0_i32 = arith.constant 0 : i32
    %c0_i32_0 = arith.constant 0 : i32
    %c0_i32_1 = arith.constant 0 : i32
    %c0_i32_2 = arith.constant 0 : i32
    return %c0_i32, %c0_i32_0, %c0_i32_1 : i32, i32, i32
  }
  func.func @transform_2(%arg0: i32) -> (i32, i32) {
    %c0_i32 = arith.constant 0 : i32
    %c0_i32_0 = arith.constant 0 : i32
    %c0_i32_1 = arith.constant 0 : i32
    return %c0_i32, %c0_i32_0 : i32, i32
  }
  func.func @transform_3(%arg0: i32) -> (i32, i32, i32) {
    %c0_i32 = arith.constant 0 : i32
    %c0_i32_0 = arith.constant 0 : i32
    %c0_i32_1 = arith.constant 0 : i32
    %c0_i32_2 = arith.constant 0 : i32
    return %c0_i32, %c0_i32_0, %c0_i32_1 : i32, i32, i32
  }
  func.func @transform_4(%arg0: i32) -> (i32, i32) {
    %c0_i32 = arith.constant 0 : i32
    %c0_i32_0 = arith.constant 0 : i32
    %c0_i32_1 = arith.constant 0 : i32
    return %c0_i32, %c0_i32_0 : i32, i32
  }
  func.func @transform_5(%arg0: i32) -> (i32, i32) {
    %c0_i32 = arith.constant 0 : i32
    %c0_i32_0 = arith.constant 0 : i32
    %c0_i32_1 = arith.constant 0 : i32
    return %c0_i32, %c0_i32_0 : i32, i32
  }
  func.func @transform_6(%arg0: i32) -> (i32, i32) {
    %c0_i32 = arith.constant 0 : i32
    %c0_i32_0 = arith.constant 0 : i32
    %c0_i32_1 = arith.constant 0 : i32
    return %c0_i32, %c0_i32_0 : i32, i32
  }
  func.func @transform_7(%arg0: i32) -> (i32, i32, i32) {
    %c0_i32 = arith.constant 0 : i32
    %c0_i32_0 = arith.constant 0 : i32
    %c0_i32_1 = arith.constant 0 : i32
    %c0_i32_2 = arith.constant 0 : i32
    return %c0_i32, %c0_i32_0, %c0_i32_1 : i32, i32, i32
  }
  func.func @transform_8(%arg0: i32) -> (i32, i32, i32) {
    %c0_i32 = arith.constant 0 : i32
    %c0_i32_0 = arith.constant 0 : i32
    %c0_i32_1 = arith.constant 0 : i32
    %c0_i32_2 = arith.constant 0 : i32
    return %c0_i32, %c0_i32_0, %c0_i32_1 : i32, i32, i32
  }
  func.func @transform_9(%arg0: i32) -> (i32, i32) {
    %c0_i32 = arith.constant 0 : i32
    %c0_i32_0 = arith.constant 0 : i32
    return %arg0, %c0_i32 : i32, i32
  }
}

</mosaic_0001>

<llo_original>
// kernel: triplet_forward.1
$region0: #{triplet_forward.1}
  #allocation0 [shape = 'u32[]', space=smem, size = 0x4, offset = 0x4, fixed_abs, tag = 'smem constant byte address 0x4 - core index']
  #allocation1 [shape = 'u32[144,128]{1,0:T(1,128)}', space=vmem, size = 0x12000, scoped, tag = 'internal scratch']
  %s0 = inlined_call_operand.vmem [shape: f32[16,8,16], index: 0, kind: input, shape index: {}]
  %s1 = inlined_call_operand.vmem [shape: bf16[3,16,128], index: 1, kind: input, shape index: {}]
  %s2 = inlined_call_operand.vmem [shape: f32[1,128], index: 2, kind: input, shape index: {}]
  %s3 = inlined_call_operand.vmem [shape: bf16[3,64,128], index: 3, kind: input, shape index: {}]
  %s4 = inlined_call_operand.vmem [shape: f32[1,128], index: 4, kind: input, shape index: {}]
  %s5 = inlined_call_operand.vmem [shape: bf16[64,128], index: 5, kind: input, shape index: {}]
  %s6 = inlined_call_operand.vmem [shape: f32[1,32], index: 6, kind: input, shape index: {}]
  %s7 = inlined_call_operand.vmem [shape: bf16[2,128,64], index: 7, kind: input, shape index: {}]
  %s8 = inlined_call_operand.vmem [shape: bf16[2,128,64], index: 8, kind: input, shape index: {}]
  %s9 = inlined_call_operand.vmem [shape: f32[8,32], index: 9, kind: output, shape index: {}]
  %s10 = sld [smem:[#allocation0]]
  $region46: #{triplet_forward.1} parent=0
    _
  %s12 = ssub.s32 1, %s10
  %s13 = scalar_select 0, %s12, %s10
  // Predicated region
  $region2: #{triplet_forward.1} parent=0 // pred_check
    _
  $region3: #{triplet_forward.1} parent=0 // pred_check_branch
    %15 = sbr.rel (0) target = $region5
  $region4: #{triplet_forward.1} parent=0 // pred_region
    _
  $region5: #{triplet_forward.1} parent=0 // pred_fallthru
    _
  // Predicated region
  $region6: #{triplet_forward.1} parent=0 // pred_check
    _
  $region7: #{triplet_forward.1} parent=0 // pred_check_branch
    %17 = sbr.rel (0) target = $region9
  $region8: #{triplet_forward.1} parent=0 // pred_region
    _
  $region9: #{triplet_forward.1} parent=0 // pred_fallthru
    _
  // Predicated region
  $region10: #{triplet_forward.1} parent=0 // pred_check
    _
  $region11: #{triplet_forward.1} parent=0 // pred_check_branch
    %19 = sbr.rel (0) target = $region13
  $region12: #{triplet_forward.1} parent=0 // pred_region
    _
  $region13: #{triplet_forward.1} parent=0 // pred_fallthru
    _
  // Predicated region
  $region14: #{triplet_forward.1} parent=0 // pred_check
    _
  $region15: #{triplet_forward.1} parent=0 // pred_check_branch
    %21 = sbr.rel (0) target = $region17
  $region16: #{triplet_forward.1} parent=0 // pred_region
    _
  $region17: #{triplet_forward.1} parent=0 // pred_fallthru
    _
  // Predicated region
  $region18: #{triplet_forward.1} parent=0 // pred_check
    _
  $region19: #{triplet_forward.1} parent=0 // pred_check_branch
    %23 = sbr.rel (0) target = $region21
  $region20: #{triplet_forward.1} parent=0 // pred_region
    _
  $region21: #{triplet_forward.1} parent=0 // pred_fallthru
    _
  // Predicated region
  $region22: #{triplet_forward.1} parent=0 // pred_check
    _
  $region23: #{triplet_forward.1} parent=0 // pred_check_branch
    %25 = sbr.rel (0) target = $region25
  $region24: #{triplet_forward.1} parent=0 // pred_region
    _
  $region25: #{triplet_forward.1} parent=0 // pred_fallthru
    _
  // Predicated region
  $region26: #{triplet_forward.1} parent=0 // pred_check
    _
  $region27: #{triplet_forward.1} parent=0 // pred_check_branch
    %27 = sbr.rel (0) target = $region29
  $region28: #{triplet_forward.1} parent=0 // pred_region
    _
  $region29: #{triplet_forward.1} parent=0 // pred_fallthru
    _
  // Predicated region
  $region30: #{triplet_forward.1} parent=0 // pred_check
    _
  $region31: #{triplet_forward.1} parent=0 // pred_check_branch
    %29 = sbr.rel (0) target = $region33
  $region32: #{triplet_forward.1} parent=0 // pred_region
    _
  $region33: #{triplet_forward.1} parent=0 // pred_fallthru
    _
  // Predicated region
  $region34: #{triplet_forward.1} parent=0 // pred_check
    _
  $region35: #{triplet_forward.1} parent=0 // pred_check_branch
    %31 = sbr.rel (0) target = $region37
  $region36: #{triplet_forward.1} parent=0 // pred_region
    _
  $region37: #{triplet_forward.1} parent=0 // pred_fallthru
    _
  %v33 = vld [vmem:[%s0] sm:$0xff]
  %v34 = vld [vmem:[%s0 + $0x8] sm:$0xff]
  %v35 = vld [vmem:[%s0 + $0x10] sm:$0xff]
  %v36 = vld [vmem:[%s0 + $0x18] sm:$0xff]
  %v37 = vld [vmem:[%s0 + $0x20] sm:$0xff]
  %v38 = vld [vmem:[%s0 + $0x28] sm:$0xff]
  %v39 = vld [vmem:[%s0 + $0x30] sm:$0xff]
  %v40 = vld [vmem:[%s0 + $0x38] sm:$0xff]
  %v41 = vld [vmem:[%s0 + $0x40] sm:$0xff]
  %v42 = vld [vmem:[%s0 + $0x48] sm:$0xff]
  %v43 = vld [vmem:[%s0 + $0x50] sm:$0xff]
  %v44 = vld [vmem:[%s0 + $0x58] sm:$0xff]
  %v45 = vld [vmem:[%s0 + $0x60] sm:$0xff]
  %v46 = vld [vmem:[%s0 + $0x68] sm:$0xff]
  %v47 = vld [vmem:[%s0 + $0x70] sm:$0xff]
  %v48 = vld [vmem:[%s0 + $0x78] sm:$0xff]
  %v49 = vpack.c.bf16 %v34, %v33
  %v50 = vpack.c.bf16 %v36, %v35
  %v51 = vpack.c.bf16 %v38, %v37
  %v52 = vpack.c.bf16 %v40, %v39
  %v53 = vpack.c.bf16 %v42, %v41
  %v54 = vpack.c.bf16 %v44, %v43
  %v55 = vpack.c.bf16 %v46, %v45
  %v56 = vpack.c.bf16 %v48, %v47
  %vm65 = vcmask 1043456
  %v66 = vrot.slane %v49, 4
  %v67 = vrot.slane %v50, 4
  %v68 = vsel %vm65, %v66, %v67
  %v69 = vrot.slane %v51, 4
  %v70 = vsel %vm65, %v67, %v69
  %v71 = vrot.slane %v52, 4
  %v72 = vsel %vm65, %v69, %v71
  %v73 = vrot.slane %v53, 4
  %v74 = vsel %vm65, %v71, %v73
  %v75 = vrot.slane %v54, 4
  %v76 = vsel %vm65, %v73, %v75
  %v77 = vrot.slane %v55, 4
  %v78 = vsel %vm65, %v75, %v77
  %v79 = vrot.slane %v56, 4
  %v80 = vsel %vm65, %v77, %v79
  %vm81 = vcmask 1043456
  %v84 = vsel %vm81, 0, %v66
  %v86 = vsel %vm81, %v79, 0
  %v87 = vld [vmem:[%s1] sm:$0xf]
  %v88 = vld [vmem:[%s1 + $0x4] sm:$0xf]
  %s89 = scalar_lea.vmem %s1, 8
  %v90 = vld [vmem:[%s89] sm:$0xf]
  %v91 = vld [vmem:[%s89 + $0x4] sm:$0xf]
  %v94 = vrot.slane %v84, 4
  %v95 = vrot.slane %v68, 4
  %v96 = vsel %vm65, %v94, %v95
  %v97 = vrot.slane %v70, 4
  %v98 = vsel %vm65, %v95, %v97
  %v99 = vrot.slane %v72, 4
  %v100 = vsel %vm65, %v97, %v99
  %v101 = vrot.slane %v74, 4
  %v102 = vsel %vm65, %v99, %v101
  %v103 = vrot.slane %v76, 4
  %v104 = vsel %vm65, %v101, %v103
  %v105 = vrot.slane %v78, 4
  %v106 = vsel %vm65, %v103, %v105
  %v107 = vrot.slane %v80, 4
  %v108 = vsel %vm65, %v105, %v107
  %v109 = vrot.slane %v86, 4
  %v110 = vsel %vm65, %v107, %v109
  %v113 = vunpack.c.l.b16 %v90
  %v114 = vunpack.c.l.b16 %v91
  %v115 = vpack.c.b16 %v114, %v113
  %vm117 = vcmask 130048
  %v119 = vsel %vm117, %v96, 0
  %v122 = vsel %vm117, %v98, 0
  %v125 = vsel %vm117, %v100, 0
  %v128 = vsel %vm117, %v102, 0
  %v131 = vsel %vm117, %v104, 0
  %v134 = vsel %vm117, %v106, 0
  %v137 = vsel %vm117, %v108, 0
  %v140 = vsel %vm117, %v110, 0
  %142 = vmatprep.subr.bf16.mxu0 0
  %143 = vmatpush1.bf16.msra.mxu0 0
  %144 = vmatprep.subr.bf16.mxu0 0
  %145 = vmatpush1.bf16.msra.mxu0 0
  %146 = vmatprep.subr.bf16.mxu0 0
  %147 = vmatpush1.bf16.msra.mxu0 0
  %148 = vmatprep.subr.bf16.mxu0 0
  %149 = vmatpush1.bf16.msra.mxu0 0
  %150 = vmatprep.subr.bf16.mxu0 0
  %151 = vmatpush1.bf16.msra.mxu0 0
  %152 = vmatprep.subr.bf16.mxu0 0
  %153 = vmatpush1.bf16.msra.mxu0 0
  %154 = vmatprep.subr.bf16.mxu0 0
  %155 = vmatpush1.bf16.msra.mxu0 0
  %156 = vmatprep.subr.bf16.mxu0 0
  %157 = vmatpush1.bf16.msra.mxu0 %v115
  %158 = vmatprep.subr.bf16.mxu0 0
  %159 = vmatpush2.bf16.msra.mxu0 0
  %160 = vmatprep.subr.bf16.mxu0 0
  %161 = vmatpush2.bf16.msra.mxu0 0
  %162 = vmatprep.subr.bf16.mxu0 0
  %163 = vmatpush2.bf16.msra.mxu0 0
  %164 = vmatprep.subr.bf16.mxu0 0
  %165 = vmatpush2.bf16.msra.mxu0 0
  %166 = vmatprep.subr.bf16.mxu0 0
  %167 = vmatpush2.bf16.msra.mxu0 0
  %168 = vmatprep.subr.bf16.mxu0 0
  %169 = vmatpush2.bf16.msra.mxu0 0
  %170 = vmatprep.subr.bf16.mxu0 0
  %171 = vmatpush2.bf16.msra.mxu0 0
  %172 = vmatprep.subr.bf16.mxu0 0
  %173 = vmatpush2.bf16.msra.mxu0 0
  %174 = vmatprep.mubr.bf16.mxu0 0
  %175 = vmatmul.mubr.bf16.gmra.mxu0 %v119
  %v176 = vpop.f32.mrf.mxu0
  %v177 = vadd.f32 0.0, %v176
  %v178 = vpop.f32.mrf.mxu0
  %v179 = vpop.f32.mrf.mxu0
  %v180 = vadd.f32 0.0, %v179
  %v181 = vpop.f32.mrf.mxu0
  %182 = vmatprep.mubr.bf16.mxu0 0
  %183 = vmatmul.mubr.bf16.gmra.mxu0 %v122
  %v184 = vpop.f32.mrf.mxu0
  %v185 = vadd.f32 0.0, %v184
  %v186 = vpop.f32.mrf.mxu0
  %v187 = vpop.f32.mrf.mxu0
  %v188 = vadd.f32 0.0, %v187
  %v189 = vpop.f32.mrf.mxu0
  %190 = vmatprep.mubr.bf16.mxu0 0
  %191 = vmatmul.mubr.bf16.gmra.mxu0 %v125
  %v192 = vpop.f32.mrf.mxu0
  %v193 = vadd.f32 0.0, %v192
  %v194 = vpop.f32.mrf.mxu0
  %v195 = vpop.f32.mrf.mxu0
  %v196 = vadd.f32 0.0, %v195
  %v197 = vpop.f32.mrf.mxu0
  %198 = vmatprep.mubr.bf16.mxu0 0
  %199 = vmatmul.mubr.bf16.gmra.mxu0 %v128
  %v200 = vpop.f32.mrf.mxu0
  %v201 = vadd.f32 0.0, %v200
  %v202 = vpop.f32.mrf.mxu0
  %v203 = vpop.f32.mrf.mxu0
  %v204 = vadd.f32 0.0, %v203
  %v205 = vpop.f32.mrf.mxu0
  %206 = vmatprep.mubr.bf16.mxu0 0
  %207 = vmatmul.mubr.bf16.gmra.mxu0 %v131
  %v208 = vpop.f32.mrf.mxu0
  %v209 = vadd.f32 0.0, %v208
  %v210 = vpop.f32.mrf.mxu0
  %v211 = vpop.f32.mrf.mxu0
  %v212 = vadd.f32 0.0, %v211
  %v213 = vpop.f32.mrf.mxu0
  %214 = vmatprep.mubr.bf16.mxu0 0
  %215 = vmatmul.mubr.bf16.gmra.mxu0 %v134
  %v216 = vpop.f32.mrf.mxu0
  %v217 = vadd.f32 0.0, %v216
  %v218 = vpop.f32.mrf.mxu0
  %v219 = vpop.f32.mrf.mxu0
  %v220 = vadd.f32 0.0, %v219
  %v221 = vpop.f32.mrf.mxu0
  %222 = vmatprep.mubr.bf16.mxu0 0
  %223 = vmatmul.mubr.bf16.gmra.mxu0 %v137
  %v224 = vpop.f32.mrf.mxu0
  %v225 = vadd.f32 0.0, %v224
  %v226 = vpop.f32.mrf.mxu0
  %v227 = vpop.f32.mrf.mxu0
  %v228 = vadd.f32 0.0, %v227
  %v229 = vpop.f32.mrf.mxu0
  %230 = vmatprep.mubr.bf16.mxu0 0
  %231 = vmatmul.mubr.bf16.gmra.mxu0 %v140
  %v232 = vpop.f32.mrf.mxu0
  %v233 = vadd.f32 0.0, %v232
  %v234 = vpop.f32.mrf.mxu0
  %v235 = vpop.f32.mrf.mxu0
  %v236 = vadd.f32 0.0, %v235
  %v237 = vpop.f32.mrf.mxu0
  %238 = vdwg.mxu0
  %v241 = vunpack.c.l.b16 %v87
  %v242 = vunpack.c.l.b16 %v88
  %v243 = vpack.c.b16 %v242, %v241
  %v245 = vsel %vm117, %v84, 0
  %v248 = vsel %vm117, %v68, 0
  %v251 = vsel %vm117, %v70, 0
  %v254 = vsel %vm117, %v72, 0
  %v257 = vsel %vm117, %v74, 0
  %v260 = vsel %vm117, %v76, 0
  %v263 = vsel %vm117, %v78, 0
  %v266 = vsel %vm117, %v80, 0
  %268 = vmatprep.subr.bf16.mxu0 0
  %269 = vmatpush1.bf16.msra.mxu0 0
  %270 = vmatprep.subr.bf16.mxu0 0
  %271 = vmatpush1.bf16.msra.mxu0 0
  %272 = vmatprep.subr.bf16.mxu0 0
  %273 = vmatpush1.bf16.msra.mxu0 0
  %274 = vmatprep.subr.bf16.mxu0 0
  %275 = vmatpush1.bf16.msra.mxu0 0
  %276 = vmatprep.subr.bf16.mxu0 0
  %277 = vmatpush1.bf16.msra.mxu0 0
  %278 = vmatprep.subr.bf16.mxu0 0
  %279 = vmatpush1.bf16.msra.mxu0 0
  %280 = vmatprep.subr.bf16.mxu0 0
  %281 = vmatpush1.bf16.msra.mxu0 0
  %282 = vmatprep.subr.bf16.mxu0 0
  %283 = vmatpush1.bf16.msra.mxu0 %v243
  %284 = vmatprep.subr.bf16.mxu0 0
  %285 = vmatpush2.bf16.msra.mxu0 0
  %286 = vmatprep.subr.bf16.mxu0 0
  %287 = vmatpush2.bf16.msra.mxu0 0
  %288 = vmatprep.subr.bf16.mxu0 0
  %289 = vmatpush2.bf16.msra.mxu0 0
  %290 = vmatprep.subr.bf16.mxu0 0
  %291 = vmatpush2.bf16.msra.mxu0 0
  %292 = vmatprep.subr.bf16.mxu0 0
  %293 = vmatpush2.bf16.msra.mxu0 0
  %294 = vmatprep.subr.bf16.mxu0 0
  %295 = vmatpush2.bf16.msra.mxu0 0
  %296 = vmatprep.subr.bf16.mxu0 0
  %297 = vmatpush2.bf16.msra.mxu0 0
  %298 = vmatprep.subr.bf16.mxu0 0
  %299 = vmatpush2.bf16.msra.mxu0 0
  %300 = vmatprep.mubr.bf16.mxu0 0
  %301 = vmatmul.mubr.bf16.gmra.mxu0 %v245
  %v302 = vpop.f32.mrf.mxu0
  %v303 = vadd.f32 %v177, %v302
  %v304 = vpop.f32.mrf.mxu0
  %v305 = vpop.f32.mrf.mxu0
  %v306 = vadd.f32 %v180, %v305
  %v307 = vpop.f32.mrf.mxu0
  %308 = vmatprep.mubr.bf16.mxu0 0
  %309 = vmatmul.mubr.bf16.gmra.mxu0 %v248
  %v310 = vpop.f32.mrf.mxu0
  %v311 = vadd.f32 %v185, %v310
  %v312 = vpop.f32.mrf.mxu0
  %v313 = vpop.f32.mrf.mxu0
  %v314 = vadd.f32 %v188, %v313
  %v315 = vpop.f32.mrf.mxu0
  %316 = vmatprep.mubr.bf16.mxu0 0
  %317 = vmatmul.mubr.bf16.gmra.mxu0 %v251
  %v318 = vpop.f32.mrf.mxu0
  %v319 = vadd.f32 %v193, %v318
  %v320 = vpop.f32.mrf.mxu0
  %v321 = vpop.f32.mrf.mxu0
  %v322 = vadd.f32 %v196, %v321
  %v323 = vpop.f32.mrf.mxu0
  %324 = vmatprep.mubr.bf16.mxu0 0
  %325 = vmatmul.mubr.bf16.gmra.mxu0 %v254
  %v326 = vpop.f32.mrf.mxu0
  %v327 = vadd.f32 %v201, %v326
  %v328 = vpop.f32.mrf.mxu0
  %v329 = vpop.f32.mrf.mxu0
  %v330 = vadd.f32 %v204, %v329
  %v331 = vpop.f32.mrf.mxu0
  %332 = vmatprep.mubr.bf16.mxu0 0
  %333 = vmatmul.mubr.bf16.gmra.mxu0 %v257
  %v334 = vpop.f32.mrf.mxu0
  %v335 = vadd.f32 %v209, %v334
  %v336 = vpop.f32.mrf.mxu0
  %v337 = vpop.f32.mrf.mxu0
  %v338 = vadd.f32 %v212, %v337
  %v339 = vpop.f32.mrf.mxu0
  %340 = vmatprep.mubr.bf16.mxu0 0
  %341 = vmatmul.mubr.bf16.gmra.mxu0 %v260
  %v342 = vpop.f32.mrf.mxu0
  %v343 = vadd.f32 %v217, %v342
  %v344 = vpop.f32.mrf.mxu0
  %v345 = vpop.f32.mrf.mxu0
  %v346 = vadd.f32 %v220, %v345
  %v347 = vpop.f32.mrf.mxu0
  %348 = vmatprep.mubr.bf16.mxu0 0
  %349 = vmatmul.mubr.bf16.gmra.mxu0 %v263
  %v350 = vpop.f32.mrf.mxu0
  %v351 = vadd.f32 %v225, %v350
  %v352 = vpop.f32.mrf.mxu0
  %v353 = vpop.f32.mrf.mxu0
  %v354 = vadd.f32 %v228, %v353
  %v355 = vpop.f32.mrf.mxu0
  %356 = vmatprep.mubr.bf16.mxu0 0
  %357 = vmatmul.mubr.bf16.gmra.mxu0 %v266
  %v358 = vpop.f32.mrf.mxu0
  %v359 = vadd.f32 %v233, %v358
  %v360 = vpop.f32.mrf.mxu0
  %v361 = vpop.f32.mrf.mxu0
  %v362 = vadd.f32 %v236, %v361
  %v363 = vpop.f32.mrf.mxu0
  %364 = vdwg.mxu0
  %s365 = scalar_lea.vmem %s1, 16
  %v366 = vld [vmem:[%s365] sm:$0xf]
  %v367 = vld [vmem:[%s365 + $0x4] sm:$0xf]
  %v370 = vunpack.c.l.b16 %v366
  %v371 = vunpack.c.l.b16 %v367
  %v372 = vpack.c.b16 %v371, %v370
  %v374 = vsel %vm117, %v86, 0
  %376 = vmatprep.subr.bf16.mxu0 0
  %377 = vmatpush1.bf16.msra.mxu0 0
  %378 = vmatprep.subr.bf16.mxu0 0
  %379 = vmatpush1.bf16.msra.mxu0 0
  %380 = vmatprep.subr.bf16.mxu0 0
  %381 = vmatpush1.bf16.msra.mxu0 0
  %382 = vmatprep.subr.bf16.mxu0 0
  %383 = vmatpush1.bf16.msra.mxu0 0
  %384 = vmatprep.subr.bf16.mxu0 0
  %385 = vmatpush1.bf16.msra.mxu0 0
  %386 = vmatprep.subr.bf16.mxu0 0
  %387 = vmatpush1.bf16.msra.mxu0 0
  %388 = vmatprep.subr.bf16.mxu0 0
  %389 = vmatpush1.bf16.msra.mxu0 0
  %390 = vmatprep.subr.bf16.mxu0 0
  %391 = vmatpush1.bf16.msra.mxu0 %v372
  %392 = vmatprep.subr.bf16.mxu0 0
  %393 = vmatpush2.bf16.msra.mxu0 0
  %394 = vmatprep.subr.bf16.mxu0 0
  %395 = vmatpush2.bf16.msra.mxu0 0
  %396 = vmatprep.subr.bf16.mxu0 0
  %397 = vmatpush2.bf16.msra.mxu0 0
  %398 = vmatprep.subr.bf16.mxu0 0
  %399 = vmatpush2.bf16.msra.mxu0 0
  %400 = vmatprep.subr.bf16.mxu0 0
  %401 = vmatpush2.bf16.msra.mxu0 0
  %402 = vmatprep.subr.bf16.mxu0 0
  %403 = vmatpush2.bf16.msra.mxu0 0
  %404 = vmatprep.subr.bf16.mxu0 0
  %405 = vmatpush2.bf16.msra.mxu0 0
  %406 = vmatprep.subr.bf16.mxu0 0
  %407 = vmatpush2.bf16.msra.mxu0 0
  %408 = vmatprep.mubr.bf16.mxu0 0
  %409 = vmatmul.mubr.bf16.gmra.mxu0 %v248
  %v410 = vpop.f32.mrf.mxu0
  %v411 = vadd.f32 0.0, %v410
  %v412 = vpop.f32.mrf.mxu0
  %v413 = vpop.f32.mrf.mxu0
  %v414 = vadd.f32 0.0, %v413
  %v415 = vpop.f32.mrf.mxu0
  %416 = vmatprep.mubr.bf16.mxu0 0
  %417 = vmatmul.mubr.bf16.gmra.mxu0 %v251
  %v418 = vpop.f32.mrf.mxu0
  %v419 = vadd.f32 0.0, %v418
  %v420 = vpop.f32.mrf.mxu0
  %v421 = vpop.f32.mrf.mxu0
  %v422 = vadd.f32 0.0, %v421
  %v423 = vpop.f32.mrf.mxu0
  %424 = vmatprep.mubr.bf16.mxu0 0
  %425 = vmatmul.mubr.bf16.gmra.mxu0 %v254
  %v426 = vpop.f32.mrf.mxu0
  %v427 = vadd.f32 0.0, %v426
  %v428 = vpop.f32.mrf.mxu0
  %v429 = vpop.f32.mrf.mxu0
  %v430 = vadd.f32 0.0, %v429
  %v431 = vpop.f32.mrf.mxu0
  %432 = vmatprep.mubr.bf16.mxu0 0
  %433 = vmatmul.mubr.bf16.gmra.mxu0 %v257
  %v434 = vpop.f32.mrf.mxu0
  %v435 = vadd.f32 0.0, %v434
  %v436 = vpop.f32.mrf.mxu0
  %v437 = vpop.f32.mrf.mxu0
  %v438 = vadd.f32 0.0, %v437
  %v439 = vpop.f32.mrf.mxu0
  %440 = vmatprep.mubr.bf16.mxu0 0
  %441 = vmatmul.mubr.bf16.gmra.mxu0 %v260
  %v442 = vpop.f32.mrf.mxu0
  %v443 = vadd.f32 0.0, %v442
  %v444 = vpop.f32.mrf.mxu0
  %v445 = vpop.f32.mrf.mxu0
  %v446 = vadd.f32 0.0, %v445
  %v447 = vpop.f32.mrf.mxu0
  %448 = vmatprep.mubr.bf16.mxu0 0
  %449 = vmatmul.mubr.bf16.gmra.mxu0 %v263
  %v450 = vpop.f32.mrf.mxu0
  %v451 = vadd.f32 0.0, %v450
  %v452 = vpop.f32.mrf.mxu0
  %v453 = vpop.f32.mrf.mxu0
  %v454 = vadd.f32 0.0, %v453
  %v455 = vpop.f32.mrf.mxu0
  %456 = vmatprep.mubr.bf16.mxu0 0
  %457 = vmatmul.mubr.bf16.gmra.mxu0 %v266
  %v458 = vpop.f32.mrf.mxu0
  %v459 = vadd.f32 0.0, %v458
  %v460 = vpop.f32.mrf.mxu0
  %v461 = vpop.f32.mrf.mxu0
  %v462 = vadd.f32 0.0, %v461
  %v463 = vpop.f32.mrf.mxu0
  %464 = vmatprep.mubr.bf16.mxu0 0
  %465 = vmatmul.mubr.bf16.gmra.mxu0 %v374
  %v466 = vpop.f32.mrf.mxu0
  %v467 = vadd.f32 0.0, %v466
  %v468 = vpop.f32.mrf.mxu0
  %v469 = vpop.f32.mrf.mxu0
  %v470 = vadd.f32 0.0, %v469
  %v471 = vpop.f32.mrf.mxu0
  %472 = vdwg.mxu0
  %v473 = vadd.f32 %v303, %v411
  %v474 = vadd.f32 %v306, %v414
  %v475 = vadd.f32 %v311, %v419
  %v476 = vadd.f32 %v314, %v422
  %v477 = vadd.f32 %v319, %v427
  %v478 = vadd.f32 %v322, %v430
  %v479 = vadd.f32 %v327, %v435
  %v480 = vadd.f32 %v330, %v438
  %v481 = vadd.f32 %v335, %v443
  %v482 = vadd.f32 %v338, %v446
  %v483 = vadd.f32 %v343, %v451
  %v484 = vadd.f32 %v346, %v454
  %v485 = vadd.f32 %v351, %v459
  %v486 = vadd.f32 %v354, %v462
  %v487 = vadd.f32 %v359, %v467
  %v488 = vadd.f32 %v362, %v470
  %v489 = vld [vmem:[%s2] sm:$0x1]
  %v491 = vlaneseq
  %v492 = vshrl.u32 %v491, 7
  %v493 = vsub.s32 0, %v492
  %v494 = vrot.slane %v489, %v493
  %v496 = vadd.f32 %v473, %v494
  %v497 = vadd.f32 %v474, %v494
  %v498 = vadd.f32 %v475, %v494
  %v499 = vadd.f32 %v476, %v494
  %v500 = vadd.f32 %v477, %v494
  %v501 = vadd.f32 %v478, %v494
  %v502 = vadd.f32 %v479, %v494
  %v503 = vadd.f32 %v480, %v494
  %v504 = vadd.f32 %v481, %v494
  %v505 = vadd.f32 %v482, %v494
  %v506 = vadd.f32 %v483, %v494
  %v507 = vadd.f32 %v484, %v494
  %v508 = vadd.f32 %v485, %v494
  %v509 = vadd.f32 %v486, %v494
  %v510 = vadd.f32 %v487, %v494
  %v511 = vadd.f32 %v488, %v494
  %v512 = vmax.f32 %v496, 0.0
  %v513 = vmax.f32 %v497, 0.0
  %v514 = vmax.f32 %v498, 0.0
  %v515 = vmax.f32 %v499, 0.0
  %v516 = vmax.f32 %v500, 0.0
  %v517 = vmax.f32 %v501, 0.0
  %v518 = vmax.f32 %v502, 0.0
  %v519 = vmax.f32 %v503, 0.0
  %v520 = vmax.f32 %v504, 0.0
  %v521 = vmax.f32 %v505, 0.0
  %v522 = vmax.f32 %v506, 0.0
  %v523 = vmax.f32 %v507, 0.0
  %v524 = vmax.f32 %v508, 0.0
  %v525 = vmax.f32 %v509, 0.0
  %v526 = vmax.f32 %v510, 0.0
  %v527 = vmax.f32 %v511, 0.0
  %v528 = vmax.f32 %v512, %v513
  %v529 = vmax.f32 %v514, %v515
  %v530 = vmax.f32 %v516, %v517
  %v531 = vmax.f32 %v518, %v519
  %v532 = vmax.f32 %v520, %v521
  %v533 = vmax.f32 %v522, %v523
  %v534 = vmax.f32 %v524, %v525
  %v535 = vmax.f32 %v526, %v527
  %v536 = vld [vmem:[%s7] sm:$0xf]
  %v537 = vld [vmem:[%s7 + $0x4] sm:$0xf]
  %v538 = vld [vmem:[%s7 + $0x8] sm:$0xf]
  %v539 = vld [vmem:[%s7 + $0xc] sm:$0xf]
  %v540 = vld [vmem:[%s7 + $0x10] sm:$0xf]
  %v541 = vld [vmem:[%s7 + $0x14] sm:$0xf]
  %v542 = vld [vmem:[%s7 + $0x18] sm:$0xf]
  %v543 = vld [vmem:[%s7 + $0x1c] sm:$0xf]
  %v544 = vld [vmem:[%s7 + $0x20] sm:$0xf]
  %v545 = vld [vmem:[%s7 + $0x24] sm:$0xf]
  %v546 = vld [vmem:[%s7 + $0x28] sm:$0xf]
  %v547 = vld [vmem:[%s7 + $0x2c] sm:$0xf]
  %v548 = vld [vmem:[%s7 + $0x30] sm:$0xf]
  %v549 = vld [vmem:[%s7 + $0x34] sm:$0xf]
  %v550 = vld [vmem:[%s7 + $0x38] sm:$0xf]
  %v551 = vld [vmem:[%s7 + $0x3c] sm:$0xf]
  %v552 = vpack.c.bf16 %v529, %v528
  %v553 = vpack.c.bf16 %v531, %v530
  %v554 = vpack.c.bf16 %v533, %v532
  %v555 = vpack.c.bf16 %v535, %v534
  %v572 = vunpack.c.l.b16 %v536
  %v573 = vunpack.c.l.b16 %v537
  %v574 = vunpack.c.l.b16 %v538
  %v575 = vunpack.c.l.b16 %v539
  %v576 = vunpack.c.l.b16 %v540
  %v577 = vunpack.c.l.b16 %v541
  %v578 = vunpack.c.l.b16 %v542
  %v579 = vunpack.c.l.b16 %v543
  %v580 = vunpack.c.l.b16 %v544
  %v581 = vunpack.c.l.b16 %v545
  %v582 = vunpack.c.l.b16 %v546
  %v583 = vunpack.c.l.b16 %v547
  %v584 = vunpack.c.l.b16 %v548
  %v585 = vunpack.c.l.b16 %v549
  %v586 = vunpack.c.l.b16 %v550
  %v587 = vunpack.c.l.b16 %v551
  %v588 = vpack.c.b16 %v573, %v572
  %v589 = vpack.c.b16 %v575, %v574
  %v590 = vpack.c.b16 %v577, %v576
  %v591 = vpack.c.b16 %v579, %v578
  %v592 = vpack.c.b16 %v581, %v580
  %v593 = vpack.c.b16 %v583, %v582
  %v594 = vpack.c.b16 %v585, %v584
  %v595 = vpack.c.b16 %v587, %v586
  %604 = vmatprep.subr.bf16.mxu0 0
  %605 = vmatpush1.bf16.msra.mxu0 %v595
  %606 = vmatprep.subr.bf16.mxu0 0
  %607 = vmatpush1.bf16.msra.mxu0 %v594
  %608 = vmatprep.subr.bf16.mxu0 0
  %609 = vmatpush1.bf16.msra.mxu0 %v593
  %610 = vmatprep.subr.bf16.mxu0 0
  %611 = vmatpush1.bf16.msra.mxu0 %v592
  %612 = vmatprep.subr.bf16.mxu0 0
  %613 = vmatpush1.bf16.msra.mxu0 %v591
  %614 = vmatprep.subr.bf16.mxu0 0
  %615 = vmatpush1.bf16.msra.mxu0 %v590
  %616 = vmatprep.subr.bf16.mxu0 0
  %617 = vmatpush1.bf16.msra.mxu0 %v589
  %618 = vmatprep.subr.bf16.mxu0 0
  %619 = vmatpush1.bf16.msra.mxu0 %v588
  %620 = vmatprep.subr.bf16.mxu0 0
  %621 = vmatpush2.bf16.msra.mxu0 0
  %622 = vmatprep.subr.bf16.mxu0 0
  %623 = vmatpush2.bf16.msra.mxu0 0
  %624 = vmatprep.subr.bf16.mxu0 0
  %625 = vmatpush2.bf16.msra.mxu0 0
  %626 = vmatprep.subr.bf16.mxu0 0
  %627 = vmatpush2.bf16.msra.mxu0 0
  %628 = vmatprep.subr.bf16.mxu0 0
  %629 = vmatpush2.bf16.msra.mxu0 0
  %630 = vmatprep.subr.bf16.mxu0 0
  %631 = vmatpush2.bf16.msra.mxu0 0
  %632 = vmatprep.subr.bf16.mxu0 0
  %633 = vmatpush2.bf16.msra.mxu0 0
  %634 = vmatprep.subr.bf16.mxu0 0
  %635 = vmatpush2.bf16.msra.mxu0 0
  %636 = vmatprep.mubr.bf16.mxu0 0
  %637 = vmatmul.mubr.bf16.gmra.mxu0 %v552
  %v638 = vpop.f32.mrf.mxu0
  %v639 = vadd.f32 0.0, %v638
  %v640 = vpop.f32.mrf.mxu0
  %v641 = vpop.f32.mrf.mxu0
  %v642 = vadd.f32 0.0, %v641
  %v643 = vpop.f32.mrf.mxu0
  %644 = vmatprep.mubr.bf16.mxu0 0
  %645 = vmatmul.mubr.bf16.gmra.mxu0 %v553
  %v646 = vpop.f32.mrf.mxu0
  %v647 = vadd.f32 0.0, %v646
  %v648 = vpop.f32.mrf.mxu0
  %v649 = vpop.f32.mrf.mxu0
  %v650 = vadd.f32 0.0, %v649
  %v651 = vpop.f32.mrf.mxu0
  %652 = vmatprep.mubr.bf16.mxu0 0
  %653 = vmatmul.mubr.bf16.gmra.mxu0 %v554
  %v654 = vpop.f32.mrf.mxu0
  %v655 = vadd.f32 0.0, %v654
  %v656 = vpop.f32.mrf.mxu0
  %v657 = vpop.f32.mrf.mxu0
  %v658 = vadd.f32 0.0, %v657
  %v659 = vpop.f32.mrf.mxu0
  %660 = vmatprep.mubr.bf16.mxu0 0
  %661 = vmatmul.mubr.bf16.gmra.mxu0 %v555
  %v662 = vpop.f32.mrf.mxu0
  %v663 = vadd.f32 0.0, %v662
  %v664 = vpop.f32.mrf.mxu0
  %v665 = vpop.f32.mrf.mxu0
  %v666 = vadd.f32 0.0, %v665
  %v667 = vpop.f32.mrf.mxu0
  %668 = vdwg.mxu0
  %s669 = scalar_lea.vmem %s7, 64
  %v670 = vld [vmem:[%s669] sm:$0xf]
  %v671 = vld [vmem:[%s669 + $0x4] sm:$0xf]
  %v672 = vld [vmem:[%s669 + $0x8] sm:$0xf]
  %v673 = vld [vmem:[%s669 + $0xc] sm:$0xf]
  %v674 = vld [vmem:[%s669 + $0x10] sm:$0xf]
  %v675 = vld [vmem:[%s669 + $0x14] sm:$0xf]
  %v676 = vld [vmem:[%s669 + $0x18] sm:$0xf]
  %v677 = vld [vmem:[%s669 + $0x1c] sm:$0xf]
  %v678 = vld [vmem:[%s669 + $0x20] sm:$0xf]
  %v679 = vld [vmem:[%s669 + $0x24] sm:$0xf]
  %v680 = vld [vmem:[%s669 + $0x28] sm:$0xf]
  %v681 = vld [vmem:[%s669 + $0x2c] sm:$0xf]
  %v682 = vld [vmem:[%s669 + $0x30] sm:$0xf]
  %v683 = vld [vmem:[%s669 + $0x34] sm:$0xf]
  %v684 = vld [vmem:[%s669 + $0x38] sm:$0xf]
  %v685 = vld [vmem:[%s669 + $0x3c] sm:$0xf]
  %v702 = vunpack.c.l.b16 %v670
  %v703 = vunpack.c.l.b16 %v671
  %v704 = vunpack.c.l.b16 %v672
  %v705 = vunpack.c.l.b16 %v673
  %v706 = vunpack.c.l.b16 %v674
  %v707 = vunpack.c.l.b16 %v675
  %v708 = vunpack.c.l.b16 %v676
  %v709 = vunpack.c.l.b16 %v677
  %v710 = vunpack.c.l.b16 %v678
  %v711 = vunpack.c.l.b16 %v679
  %v712 = vunpack.c.l.b16 %v680
  %v713 = vunpack.c.l.b16 %v681
  %v714 = vunpack.c.l.b16 %v682
  %v715 = vunpack.c.l.b16 %v683
  %v716 = vunpack.c.l.b16 %v684
  %v717 = vunpack.c.l.b16 %v685
  %v718 = vpack.c.b16 %v703, %v702
  %v719 = vpack.c.b16 %v705, %v704
  %v720 = vpack.c.b16 %v707, %v706
  %v721 = vpack.c.b16 %v709, %v708
  %v722 = vpack.c.b16 %v711, %v710
  %v723 = vpack.c.b16 %v713, %v712
  %v724 = vpack.c.b16 %v715, %v714
  %v725 = vpack.c.b16 %v717, %v716
  %734 = vmatprep.subr.bf16.mxu0 0
  %735 = vmatpush1.bf16.msra.mxu0 %v725
  %736 = vmatprep.subr.bf16.mxu0 0
  %737 = vmatpush1.bf16.msra.mxu0 %v724
  %738 = vmatprep.subr.bf16.mxu0 0
  %739 = vmatpush1.bf16.msra.mxu0 %v723
  %740 = vmatprep.subr.bf16.mxu0 0
  %741 = vmatpush1.bf16.msra.mxu0 %v722
  %742 = vmatprep.subr.bf16.mxu0 0
  %743 = vmatpush1.bf16.msra.mxu0 %v721
  %744 = vmatprep.subr.bf16.mxu0 0
  %745 = vmatpush1.bf16.msra.mxu0 %v720
  %746 = vmatprep.subr.bf16.mxu0 0
  %747 = vmatpush1.bf16.msra.mxu0 %v719
  %748 = vmatprep.subr.bf16.mxu0 0
  %749 = vmatpush1.bf16.msra.mxu0 %v718
  %750 = vmatprep.subr.bf16.mxu0 0
  %751 = vmatpush2.bf16.msra.mxu0 0
  %752 = vmatprep.subr.bf16.mxu0 0
  %753 = vmatpush2.bf16.msra.mxu0 0
  %754 = vmatprep.subr.bf16.mxu0 0
  %755 = vmatpush2.bf16.msra.mxu0 0
  %756 = vmatprep.subr.bf16.mxu0 0
  %757 = vmatpush2.bf16.msra.mxu0 0
  %758 = vmatprep.subr.bf16.mxu0 0
  %759 = vmatpush2.bf16.msra.mxu0 0
  %760 = vmatprep.subr.bf16.mxu0 0
  %761 = vmatpush2.bf16.msra.mxu0 0
  %762 = vmatprep.subr.bf16.mxu0 0
  %763 = vmatpush2.bf16.msra.mxu0 0
  %764 = vmatprep.subr.bf16.mxu0 0
  %765 = vmatpush2.bf16.msra.mxu0 0
  %766 = vmatprep.mubr.bf16.mxu0 0
  %767 = vmatmul.mubr.bf16.gmra.mxu0 %v552
  %v768 = vpop.f32.mrf.mxu0
  %v769 = vadd.f32 0.0, %v768
  %v770 = vpop.f32.mrf.mxu0
  %v771 = vpop.f32.mrf.mxu0
  %v772 = vadd.f32 0.0, %v771
  %v773 = vpop.f32.mrf.mxu0
  %774 = vmatprep.mubr.bf16.mxu0 0
  %775 = vmatmul.mubr.bf16.gmra.mxu0 %v553
  %v776 = vpop.f32.mrf.mxu0
  %v777 = vadd.f32 0.0, %v776
  %v778 = vpop.f32.mrf.mxu0
  %v779 = vpop.f32.mrf.mxu0
  %v780 = vadd.f32 0.0, %v779
  %v781 = vpop.f32.mrf.mxu0
  %782 = vmatprep.mubr.bf16.mxu0 0
  %783 = vmatmul.mubr.bf16.gmra.mxu0 %v554
  %v784 = vpop.f32.mrf.mxu0
  %v785 = vadd.f32 0.0, %v784
  %v786 = vpop.f32.mrf.mxu0
  %v787 = vpop.f32.mrf.mxu0
  %v788 = vadd.f32 0.0, %v787
  %v789 = vpop.f32.mrf.mxu0
  %790 = vmatprep.mubr.bf16.mxu0 0
  %791 = vmatmul.mubr.bf16.gmra.mxu0 %v555
  %v792 = vpop.f32.mrf.mxu0
  %v793 = vadd.f32 0.0, %v792
  %v794 = vpop.f32.mrf.mxu0
  %v795 = vpop.f32.mrf.mxu0
  %v796 = vadd.f32 0.0, %v795
  %v797 = vpop.f32.mrf.mxu0
  %798 = vdwg.mxu0
  %v799 = vmax.f32 %v639, %v769
  %v800 = vmax.f32 %v642, %v772
  %v801 = vmax.f32 %v647, %v777
  %v802 = vmax.f32 %v650, %v780
  %v803 = vmax.f32 %v655, %v785
  %v804 = vmax.f32 %v658, %v788
  %v805 = vmax.f32 %v663, %v793
  %v806 = vmax.f32 %v666, %v796
  %v807 = vpack.c.bf16 %v800, %v799
  %v808 = vpack.c.bf16 %v802, %v801
  %v809 = vpack.c.bf16 %v804, %v803
  %v810 = vpack.c.bf16 %v806, %v805
  %v815 = vrot.slane %v807, 4
  %v816 = vrot.slane %v808, 4
  %v817 = vsel %vm65, %v815, %v816
  %v818 = vrot.slane %v809, 4
  %v819 = vsel %vm65, %v816, %v818
  %v820 = vrot.slane %v810, 4
  %v821 = vsel %vm65, %v818, %v820
  %v823 = vsel %vm81, 0, %v815
  %v825 = vsel %vm81, %v820, 0
  %v826 = vld [vmem:[%s3] sm:$0xf]
  %v827 = vld [vmem:[%s3 + $0x4] sm:$0xf]
  %v828 = vld [vmem:[%s3 + $0x8] sm:$0xf]
  %v829 = vld [vmem:[%s3 + $0xc] sm:$0xf]
  %v830 = vld [vmem:[%s3 + $0x10] sm:$0xf]
  %v831 = vld [vmem:[%s3 + $0x14] sm:$0xf]
  %v832 = vld [vmem:[%s3 + $0x18] sm:$0xf]
  %v833 = vld [vmem:[%s3 + $0x1c] sm:$0xf]
  %s834 = scalar_lea.vmem %s3, 32
  %v835 = vld [vmem:[%s834] sm:$0xf]
  %v836 = vld [vmem:[%s834 + $0x4] sm:$0xf]
  %v837 = vld [vmem:[%s834 + $0x8] sm:$0xf]
  %v838 = vld [vmem:[%s834 + $0xc] sm:$0xf]
  %v839 = vld [vmem:[%s834 + $0x10] sm:$0xf]
  %v840 = vld [vmem:[%s834 + $0x14] sm:$0xf]
  %v841 = vld [vmem:[%s834 + $0x18] sm:$0xf]
  %v842 = vld [vmem:[%s834 + $0x1c] sm:$0xf]
  %v845 = vrot.slane %v823, 4
  %v846 = vrot.slane %v817, 4
  %v847 = vsel %vm65, %v845, %v846
  %v848 = vrot.slane %v819, 4
  %v849 = vsel %vm65, %v846, %v848
  %v850 = vrot.slane %v821, 4
  %v851 = vsel %vm65, %v848, %v850
  %v852 = vrot.slane %v825, 4
  %v853 = vsel %vm65, %v850, %v852
  %v862 = vunpack.c.l.b16 %v835
  %v863 = vunpack.c.l.b16 %v836
  %v864 = vunpack.c.l.b16 %v837
  %v865 = vunpack.c.l.b16 %v838
  %v866 = vunpack.c.l.b16 %v839
  %v867 = vunpack.c.l.b16 %v840
  %v868 = vunpack.c.l.b16 %v841
  %v869 = vunpack.c.l.b16 %v842
  %v870 = vpack.c.b16 %v863, %v862
  %v871 = vpack.c.b16 %v865, %v864
  %v872 = vpack.c.b16 %v867, %v866
  %v873 = vpack.c.b16 %v869, %v868
  %vm878 = vcmask 523264
  %v880 = vsel %vm878, %v847, 0
  %v883 = vsel %vm878, %v849, 0
  %v886 = vsel %vm878, %v851, 0
  %v889 = vsel %vm878, %v853, 0
  %891 = vmatprep.subr.bf16.mxu0 0
  %892 = vmatpush1.bf16.msra.mxu0 0
  %893 = vmatprep.subr.bf16.mxu0 0
  %894 = vmatpush1.bf16.msra.mxu0 0
  %895 = vmatprep.subr.bf16.mxu0 0
  %896 = vmatpush1.bf16.msra.mxu0 0
  %897 = vmatprep.subr.bf16.mxu0 0
  %898 = vmatpush1.bf16.msra.mxu0 0
  %899 = vmatprep.subr.bf16.mxu0 0
  %900 = vmatpush1.bf16.msra.mxu0 %v873
  %901 = vmatprep.subr.bf16.mxu0 0
  %902 = vmatpush1.bf16.msra.mxu0 %v872
  %903 = vmatprep.subr.bf16.mxu0 0
  %904 = vmatpush1.bf16.msra.mxu0 %v871
  %905 = vmatprep.subr.bf16.mxu0 0
  %906 = vmatpush1.bf16.msra.mxu0 %v870
  %907 = vmatprep.subr.bf16.mxu0 0
  %908 = vmatpush2.bf16.msra.mxu0 0
  %909 = vmatprep.subr.bf16.mxu0 0
  %910 = vmatpush2.bf16.msra.mxu0 0
  %911 = vmatprep.subr.bf16.mxu0 0
  %912 = vmatpush2.bf16.msra.mxu0 0
  %913 = vmatprep.subr.bf16.mxu0 0
  %914 = vmatpush2.bf16.msra.mxu0 0
  %915 = vmatprep.subr.bf16.mxu0 0
  %916 = vmatpush2.bf16.msra.mxu0 0
  %917 = vmatprep.subr.bf16.mxu0 0
  %918 = vmatpush2.bf16.msra.mxu0 0
  %919 = vmatprep.subr.bf16.mxu0 0
  %920 = vmatpush2.bf16.msra.mxu0 0
  %921 = vmatprep.subr.bf16.mxu0 0
  %922 = vmatpush2.bf16.msra.mxu0 0
  %923 = vmatprep.mubr.bf16.mxu0 0
  %924 = vmatmul.mubr.bf16.gmra.mxu0 %v880
  %v925 = vpop.f32.mrf.mxu0
  %v926 = vadd.f32 0.0, %v925
  %v927 = vpop.f32.mrf.mxu0
  %v928 = vpop.f32.mrf.mxu0
  %v929 = vadd.f32 0.0, %v928
  %v930 = vpop.f32.mrf.mxu0
  %931 = vmatprep.mubr.bf16.mxu0 0
  %932 = vmatmul.mubr.bf16.gmra.mxu0 %v883
  %v933 = vpop.f32.mrf.mxu0
  %v934 = vadd.f32 0.0, %v933
  %v935 = vpop.f32.mrf.mxu0
  %v936 = vpop.f32.mrf.mxu0
  %v937 = vadd.f32 0.0, %v936
  %v938 = vpop.f32.mrf.mxu0
  %939 = vmatprep.mubr.bf16.mxu0 0
  %940 = vmatmul.mubr.bf16.gmra.mxu0 %v886
  %v941 = vpop.f32.mrf.mxu0
  %v942 = vadd.f32 0.0, %v941
  %v943 = vpop.f32.mrf.mxu0
  %v944 = vpop.f32.mrf.mxu0
  %v945 = vadd.f32 0.0, %v944
  %v946 = vpop.f32.mrf.mxu0
  %947 = vmatprep.mubr.bf16.mxu0 0
  %948 = vmatmul.mubr.bf16.gmra.mxu0 %v889
  %v949 = vpop.f32.mrf.mxu0
  %v950 = vadd.f32 0.0, %v949
  %v951 = vpop.f32.mrf.mxu0
  %v952 = vpop.f32.mrf.mxu0
  %v953 = vadd.f32 0.0, %v952
  %v954 = vpop.f32.mrf.mxu0
  %955 = vdwg.mxu0
  %v964 = vunpack.c.l.b16 %v826
  %v965 = vunpack.c.l.b16 %v827
  %v966 = vunpack.c.l.b16 %v828
  %v967 = vunpack.c.l.b16 %v829
  %v968 = vunpack.c.l.b16 %v830
  %v969 = vunpack.c.l.b16 %v831
  %v970 = vunpack.c.l.b16 %v832
  %v971 = vunpack.c.l.b16 %v833
  %v972 = vpack.c.b16 %v965, %v964
  %v973 = vpack.c.b16 %v967, %v966
  %v974 = vpack.c.b16 %v969, %v968
  %v975 = vpack.c.b16 %v971, %v970
  %v980 = vsel %vm878, %v823, 0
  %v983 = vsel %vm878, %v817, 0
  %v986 = vsel %vm878, %v819, 0
  %v989 = vsel %vm878, %v821, 0
  %991 = vmatprep.subr.bf16.mxu0 0
  %992 = vmatpush1.bf16.msra.mxu0 0
  %993 = vmatprep.subr.bf16.mxu0 0
  %994 = vmatpush1.bf16.msra.mxu0 0
  %995 = vmatprep.subr.bf16.mxu0 0
  %996 = vmatpush1.bf16.msra.mxu0 0
  %997 = vmatprep.subr.bf16.mxu0 0
  %998 = vmatpush1.bf16.msra.mxu0 0
  %999 = vmatprep.subr.bf16.mxu0 0
  %1000 = vmatpush1.bf16.msra.mxu0 %v975
  %1001 = vmatprep.subr.bf16.mxu0 0
  %1002 = vmatpush1.bf16.msra.mxu0 %v974
  %1003 = vmatprep.subr.bf16.mxu0 0
  %1004 = vmatpush1.bf16.msra.mxu0 %v973
  %1005 = vmatprep.subr.bf16.mxu0 0
  %1006 = vmatpush1.bf16.msra.mxu0 %v972
  %1007 = vmatprep.subr.bf16.mxu0 0
  %1008 = vmatpush2.bf16.msra.mxu0 0
  %1009 = vmatprep.subr.bf16.mxu0 0
  %1010 = vmatpush2.bf16.msra.mxu0 0
  %1011 = vmatprep.subr.bf16.mxu0 0
  %1012 = vmatpush2.bf16.msra.mxu0 0
  %1013 = vmatprep.subr.bf16.mxu0 0
  %1014 = vmatpush2.bf16.msra.mxu0 0
  %1015 = vmatprep.subr.bf16.mxu0 0
  %1016 = vmatpush2.bf16.msra.mxu0 0
  %1017 = vmatprep.subr.bf16.mxu0 0
  %1018 = vmatpush2.bf16.msra.mxu0 0
  %1019 = vmatprep.subr.bf16.mxu0 0
  %1020 = vmatpush2.bf16.msra.mxu0 0
  %1021 = vmatprep.subr.bf16.mxu0 0
  %1022 = vmatpush2.bf16.msra.mxu0 0
  %1023 = vmatprep.mubr.bf16.mxu0 0
  %1024 = vmatmul.mubr.bf16.gmra.mxu0 %v980
  %v1025 = vpop.f32.mrf.mxu0
  %v1026 = vadd.f32 %v926, %v1025
  %v1027 = vpop.f32.mrf.mxu0
  %v1028 = vpop.f32.mrf.mxu0
  %v1029 = vadd.f32 %v929, %v1028
  %v1030 = vpop.f32.mrf.mxu0
  %1031 = vmatprep.mubr.bf16.mxu0 0
  %1032 = vmatmul.mubr.bf16.gmra.mxu0 %v983
  %v1033 = vpop.f32.mrf.mxu0
  %v1034 = vadd.f32 %v934, %v1033
  %v1035 = vpop.f32.mrf.mxu0
  %v1036 = vpop.f32.mrf.mxu0
  %v1037 = vadd.f32 %v937, %v1036
  %v1038 = vpop.f32.mrf.mxu0
  %1039 = vmatprep.mubr.bf16.mxu0 0
  %1040 = vmatmul.mubr.bf16.gmra.mxu0 %v986
  %v1041 = vpop.f32.mrf.mxu0
  %v1042 = vadd.f32 %v942, %v1041
  %v1043 = vpop.f32.mrf.mxu0
  %v1044 = vpop.f32.mrf.mxu0
  %v1045 = vadd.f32 %v945, %v1044
  %v1046 = vpop.f32.mrf.mxu0
  %1047 = vmatprep.mubr.bf16.mxu0 0
  %1048 = vmatmul.mubr.bf16.gmra.mxu0 %v989
  %v1049 = vpop.f32.mrf.mxu0
  %v1050 = vadd.f32 %v950, %v1049
  %v1051 = vpop.f32.mrf.mxu0
  %v1052 = vpop.f32.mrf.mxu0
  %v1053 = vadd.f32 %v953, %v1052
  %v1054 = vpop.f32.mrf.mxu0
  %1055 = vdwg.mxu0
  %s1056 = scalar_lea.vmem %s3, 64
  %v1057 = vld [vmem:[%s1056] sm:$0xf]
  %v1058 = vld [vmem:[%s1056 + $0x4] sm:$0xf]
  %v1059 = vld [vmem:[%s1056 + $0x8] sm:$0xf]
  %v1060 = vld [vmem:[%s1056 + $0xc] sm:$0xf]
  %v1061 = vld [vmem:[%s1056 + $0x10] sm:$0xf]
  %v1062 = vld [vmem:[%s1056 + $0x14] sm:$0xf]
  %v1063 = vld [vmem:[%s1056 + $0x18] sm:$0xf]
  %v1064 = vld [vmem:[%s1056 + $0x1c] sm:$0xf]
  %v1073 = vunpack.c.l.b16 %v1057
  %v1074 = vunpack.c.l.b16 %v1058
  %v1075 = vunpack.c.l.b16 %v1059
  %v1076 = vunpack.c.l.b16 %v1060
  %v1077 = vunpack.c.l.b16 %v1061
  %v1078 = vunpack.c.l.b16 %v1062
  %v1079 = vunpack.c.l.b16 %v1063
  %v1080 = vunpack.c.l.b16 %v1064
  %v1081 = vpack.c.b16 %v1074, %v1073
  %v1082 = vpack.c.b16 %v1076, %v1075
  %v1083 = vpack.c.b16 %v1078, %v1077
  %v1084 = vpack.c.b16 %v1080, %v1079
  %v1089 = vsel %vm878, %v825, 0
  %1091 = vmatprep.subr.bf16.mxu0 0
  %1092 = vmatpush1.bf16.msra.mxu0 0
  %1093 = vmatprep.subr.bf16.mxu0 0
  %1094 = vmatpush1.bf16.msra.mxu0 0
  %1095 = vmatprep.subr.bf16.mxu0 0
  %1096 = vmatpush1.bf16.msra.mxu0 0
  %1097 = vmatprep.subr.bf16.mxu0 0
  %1098 = vmatpush1.bf16.msra.mxu0 0
  %1099 = vmatprep.subr.bf16.mxu0 0
  %1100 = vmatpush1.bf16.msra.mxu0 %v1084
  %1101 = vmatprep.subr.bf16.mxu0 0
  %1102 = vmatpush1.bf16.msra.mxu0 %v1083
  %1103 = vmatprep.subr.bf16.mxu0 0
  %1104 = vmatpush1.bf16.msra.mxu0 %v1082
  %1105 = vmatprep.subr.bf16.mxu0 0
  %1106 = vmatpush1.bf16.msra.mxu0 %v1081
  %1107 = vmatprep.subr.bf16.mxu0 0
  %1108 = vmatpush2.bf16.msra.mxu0 0
  %1109 = vmatprep.subr.bf16.mxu0 0
  %1110 = vmatpush2.bf16.msra.mxu0 0
  %1111 = vmatprep.subr.bf16.mxu0 0
  %1112 = vmatpush2.bf16.msra.mxu0 0
  %1113 = vmatprep.subr.bf16.mxu0 0
  %1114 = vmatpush2.bf16.msra.mxu0 0
  %1115 = vmatprep.subr.bf16.mxu0 0
  %1116 = vmatpush2.bf16.msra.mxu0 0
  %1117 = vmatprep.subr.bf16.mxu0 0
  %1118 = vmatpush2.bf16.msra.mxu0 0
  %1119 = vmatprep.subr.bf16.mxu0 0
  %1120 = vmatpush2.bf16.msra.mxu0 0
  %1121 = vmatprep.subr.bf16.mxu0 0
  %1122 = vmatpush2.bf16.msra.mxu0 0
  %1123 = vmatprep.mubr.bf16.mxu0 0
  %1124 = vmatmul.mubr.bf16.gmra.mxu0 %v983
  %v1125 = vpop.f32.mrf.mxu0
  %v1126 = vadd.f32 0.0, %v1125
  %v1127 = vpop.f32.mrf.mxu0
  %v1128 = vpop.f32.mrf.mxu0
  %v1129 = vadd.f32 0.0, %v1128
  %v1130 = vpop.f32.mrf.mxu0
  %1131 = vmatprep.mubr.bf16.mxu0 0
  %1132 = vmatmul.mubr.bf16.gmra.mxu0 %v986
  %v1133 = vpop.f32.mrf.mxu0
  %v1134 = vadd.f32 0.0, %v1133
  %v1135 = vpop.f32.mrf.mxu0
  %v1136 = vpop.f32.mrf.mxu0
  %v1137 = vadd.f32 0.0, %v1136
  %v1138 = vpop.f32.mrf.mxu0
  %1139 = vmatprep.mubr.bf16.mxu0 0
  %1140 = vmatmul.mubr.bf16.gmra.mxu0 %v989
  %v1141 = vpop.f32.mrf.mxu0
  %v1142 = vadd.f32 0.0, %v1141
  %v1143 = vpop.f32.mrf.mxu0
  %v1144 = vpop.f32.mrf.mxu0
  %v1145 = vadd.f32 0.0, %v1144
  %v1146 = vpop.f32.mrf.mxu0
  %1147 = vmatprep.mubr.bf16.mxu0 0
  %1148 = vmatmul.mubr.bf16.gmra.mxu0 %v1089
  %v1149 = vpop.f32.mrf.mxu0
  %v1150 = vadd.f32 0.0, %v1149
  %v1151 = vpop.f32.mrf.mxu0
  %v1152 = vpop.f32.mrf.mxu0
  %v1153 = vadd.f32 0.0, %v1152
  %v1154 = vpop.f32.mrf.mxu0
  %1155 = vdwg.mxu0
  %v1156 = vadd.f32 %v1026, %v1126
  %v1157 = vadd.f32 %v1029, %v1129
  %v1158 = vadd.f32 %v1034, %v1134
  %v1159 = vadd.f32 %v1037, %v1137
  %v1160 = vadd.f32 %v1042, %v1142
  %v1161 = vadd.f32 %v1045, %v1145
  %v1162 = vadd.f32 %v1050, %v1150
  %v1163 = vadd.f32 %v1053, %v1153
  %v1164 = vld [vmem:[%s4] sm:$0x1]
  %v1166 = vlaneseq
  %v1167 = vshrl.u32 %v1166, 7
  %v1168 = vsub.s32 0, %v1167
  %v1169 = vrot.slane %v1164, %v1168
  %v1171 = vadd.f32 %v1156, %v1169
  %v1172 = vadd.f32 %v1157, %v1169
  %v1173 = vadd.f32 %v1158, %v1169
  %v1174 = vadd.f32 %v1159, %v1169
  %v1175 = vadd.f32 %v1160, %v1169
  %v1176 = vadd.f32 %v1161, %v1169
  %v1177 = vadd.f32 %v1162, %v1169
  %v1178 = vadd.f32 %v1163, %v1169
  %v1179 = vmax.f32 %v1171, 0.0
  %v1180 = vmax.f32 %v1172, 0.0
  %v1181 = vmax.f32 %v1173, 0.0
  %v1182 = vmax.f32 %v1174, 0.0
  %v1183 = vmax.f32 %v1175, 0.0
  %v1184 = vmax.f32 %v1176, 0.0
  %v1185 = vmax.f32 %v1177, 0.0
  %v1186 = vmax.f32 %v1178, 0.0
  %v1187 = vmax.f32 %v1179, %v1180
  %v1188 = vmax.f32 %v1181, %v1182
  %v1189 = vmax.f32 %v1183, %v1184
  %v1190 = vmax.f32 %v1185, %v1186
  %v1191 = vld [vmem:[%s8] sm:$0xf]
  %v1192 = vld [vmem:[%s8 + $0x4] sm:$0xf]
  %v1193 = vld [vmem:[%s8 + $0x8] sm:$0xf]
  %v1194 = vld [vmem:[%s8 + $0xc] sm:$0xf]
  %v1195 = vld [vmem:[%s8 + $0x10] sm:$0xf]
  %v1196 = vld [vmem:[%s8 + $0x14] sm:$0xf]
  %v1197 = vld [vmem:[%s8 + $0x18] sm:$0xf]
  %v1198 = vld [vmem:[%s8 + $0x1c] sm:$0xf]
  %v1199 = vld [vmem:[%s8 + $0x20] sm:$0xf]
  %v1200 = vld [vmem:[%s8 + $0x24] sm:$0xf]
  %v1201 = vld [vmem:[%s8 + $0x28] sm:$0xf]
  %v1202 = vld [vmem:[%s8 + $0x2c] sm:$0xf]
  %v1203 = vld [vmem:[%s8 + $0x30] sm:$0xf]
  %v1204 = vld [vmem:[%s8 + $0x34] sm:$0xf]
  %v1205 = vld [vmem:[%s8 + $0x38] sm:$0xf]
  %v1206 = vld [vmem:[%s8 + $0x3c] sm:$0xf]
  %v1207 = vpack.c.bf16 %v1188, %v1187
  %v1208 = vpack.c.bf16 %v1190, %v1189
  %v1225 = vunpack.c.l.b16 %v1191
  %v1226 = vunpack.c.l.b16 %v1192
  %v1227 = vunpack.c.l.b16 %v1193
  %v1228 = vunpack.c.l.b16 %v1194
  %v1229 = vunpack.c.l.b16 %v1195
  %v1230 = vunpack.c.l.b16 %v1196
  %v1231 = vunpack.c.l.b16 %v1197
  %v1232 = vunpack.c.l.b16 %v1198
  %v1233 = vunpack.c.l.b16 %v1199
  %v1234 = vunpack.c.l.b16 %v1200
  %v1235 = vunpack.c.l.b16 %v1201
  %v1236 = vunpack.c.l.b16 %v1202
  %v1237 = vunpack.c.l.b16 %v1203
  %v1238 = vunpack.c.l.b16 %v1204
  %v1239 = vunpack.c.l.b16 %v1205
  %v1240 = vunpack.c.l.b16 %v1206
  %v1241 = vpack.c.b16 %v1226, %v1225
  %v1242 = vpack.c.b16 %v1228, %v1227
  %v1243 = vpack.c.b16 %v1230, %v1229
  %v1244 = vpack.c.b16 %v1232, %v1231
  %v1245 = vpack.c.b16 %v1234, %v1233
  %v1246 = vpack.c.b16 %v1236, %v1235
  %v1247 = vpack.c.b16 %v1238, %v1237
  %v1248 = vpack.c.b16 %v1240, %v1239
  %1257 = vmatprep.subr.bf16.mxu0 0
  %1258 = vmatpush1.bf16.msra.mxu0 %v1248
  %1259 = vmatprep.subr.bf16.mxu0 0
  %1260 = vmatpush1.bf16.msra.mxu0 %v1247
  %1261 = vmatprep.subr.bf16.mxu0 0
  %1262 = vmatpush1.bf16.msra.mxu0 %v1246
  %1263 = vmatprep.subr.bf16.mxu0 0
  %1264 = vmatpush1.bf16.msra.mxu0 %v1245
  %1265 = vmatprep.subr.bf16.mxu0 0
  %1266 = vmatpush1.bf16.msra.mxu0 %v1244
  %1267 = vmatprep.subr.bf16.mxu0 0
  %1268 = vmatpush1.bf16.msra.mxu0 %v1243
  %1269 = vmatprep.subr.bf16.mxu0 0
  %1270 = vmatpush1.bf16.msra.mxu0 %v1242
  %1271 = vmatprep.subr.bf16.mxu0 0
  %1272 = vmatpush1.bf16.msra.mxu0 %v1241
  %1273 = vmatprep.subr.bf16.mxu0 0
  %1274 = vmatpush2.bf16.msra.mxu0 0
  %1275 = vmatprep.subr.bf16.mxu0 0
  %1276 = vmatpush2.bf16.msra.mxu0 0
  %1277 = vmatprep.subr.bf16.mxu0 0
  %1278 = vmatpush2.bf16.msra.mxu0 0
  %1279 = vmatprep.subr.bf16.mxu0 0
  %1280 = vmatpush2.bf16.msra.mxu0 0
  %1281 = vmatprep.subr.bf16.mxu0 0
  %1282 = vmatpush2.bf16.msra.mxu0 0
  %1283 = vmatprep.subr.bf16.mxu0 0
  %1284 = vmatpush2.bf16.msra.mxu0 0
  %1285 = vmatprep.subr.bf16.mxu0 0
  %1286 = vmatpush2.bf16.msra.mxu0 0
  %1287 = vmatprep.subr.bf16.mxu0 0
  %1288 = vmatpush2.bf16.msra.mxu0 0
  %1289 = vmatprep.mubr.bf16.mxu0 0
  %1290 = vmatmul.mubr.bf16.gmra.mxu0 %v1207
  %v1291 = vpop.f32.mrf.mxu0
  %v1292 = vadd.f32 0.0, %v1291
  %v1293 = vpop.f32.mrf.mxu0
  %v1294 = vpop.f32.mrf.mxu0
  %v1295 = vadd.f32 0.0, %v1294
  %v1296 = vpop.f32.mrf.mxu0
  %1297 = vmatprep.mubr.bf16.mxu0 0
  %1298 = vmatmul.mubr.bf16.gmra.mxu0 %v1208
  %v1299 = vpop.f32.mrf.mxu0
  %v1300 = vadd.f32 0.0, %v1299
  %v1301 = vpop.f32.mrf.mxu0
  %v1302 = vpop.f32.mrf.mxu0
  %v1303 = vadd.f32 0.0, %v1302
  %v1304 = vpop.f32.mrf.mxu0
  %1305 = vdwg.mxu0
  %s1306 = scalar_lea.vmem %s8, 64
  %v1307 = vld [vmem:[%s1306] sm:$0xf]
  %v1308 = vld [vmem:[%s1306 + $0x4] sm:$0xf]
  %v1309 = vld [vmem:[%s1306 + $0x8] sm:$0xf]
  %v1310 = vld [vmem:[%s1306 + $0xc] sm:$0xf]
  %v1311 = vld [vmem:[%s1306 + $0x10] sm:$0xf]
  %v1312 = vld [vmem:[%s1306 + $0x14] sm:$0xf]
  %v1313 = vld [vmem:[%s1306 + $0x18] sm:$0xf]
  %v1314 = vld [vmem:[%s1306 + $0x1c] sm:$0xf]
  %v1315 = vld [vmem:[%s1306 + $0x20] sm:$0xf]
  %v1316 = vld [vmem:[%s1306 + $0x24] sm:$0xf]
  %v1317 = vld [vmem:[%s1306 + $0x28] sm:$0xf]
  %v1318 = vld [vmem:[%s1306 + $0x2c] sm:$0xf]
  %v1319 = vld [vmem:[%s1306 + $0x30] sm:$0xf]
  %v1320 = vld [vmem:[%s1306 + $0x34] sm:$0xf]
  %v1321 = vld [vmem:[%s1306 + $0x38] sm:$0xf]
  %v1322 = vld [vmem:[%s1306 + $0x3c] sm:$0xf]
  %v1339 = vunpack.c.l.b16 %v1307
  %v1340 = vunpack.c.l.b16 %v1308
  %v1341 = vunpack.c.l.b16 %v1309
  %v1342 = vunpack.c.l.b16 %v1310
  %v1343 = vunpack.c.l.b16 %v1311
  %v1344 = vunpack.c.l.b16 %v1312
  %v1345 = vunpack.c.l.b16 %v1313
  %v1346 = vunpack.c.l.b16 %v1314
  %v1347 = vunpack.c.l.b16 %v1315
  %v1348 = vunpack.c.l.b16 %v1316
  %v1349 = vunpack.c.l.b16 %v1317
  %v1350 = vunpack.c.l.b16 %v1318
  %v1351 = vunpack.c.l.b16 %v1319
  %v1352 = vunpack.c.l.b16 %v1320
  %v1353 = vunpack.c.l.b16 %v1321
  %v1354 = vunpack.c.l.b16 %v1322
  %v1355 = vpack.c.b16 %v1340, %v1339
  %v1356 = vpack.c.b16 %v1342, %v1341
  %v1357 = vpack.c.b16 %v1344, %v1343
  %v1358 = vpack.c.b16 %v1346, %v1345
  %v1359 = vpack.c.b16 %v1348, %v1347
  %v1360 = vpack.c.b16 %v1350, %v1349
  %v1361 = vpack.c.b16 %v1352, %v1351
  %v1362 = vpack.c.b16 %v1354, %v1353
  %1371 = vmatprep.subr.bf16.mxu0 0
  %1372 = vmatpush1.bf16.msra.mxu0 %v1362
  %1373 = vmatprep.subr.bf16.mxu0 0
  %1374 = vmatpush1.bf16.msra.mxu0 %v1361
  %1375 = vmatprep.subr.bf16.mxu0 0
  %1376 = vmatpush1.bf16.msra.mxu0 %v1360
  %1377 = vmatprep.subr.bf16.mxu0 0
  %1378 = vmatpush1.bf16.msra.mxu0 %v1359
  %1379 = vmatprep.subr.bf16.mxu0 0
  %1380 = vmatpush1.bf16.msra.mxu0 %v1358
  %1381 = vmatprep.subr.bf16.mxu0 0
  %1382 = vmatpush1.bf16.msra.mxu0 %v1357
  %1383 = vmatprep.subr.bf16.mxu0 0
  %1384 = vmatpush1.bf16.msra.mxu0 %v1356
  %1385 = vmatprep.subr.bf16.mxu0 0
  %1386 = vmatpush1.bf16.msra.mxu0 %v1355
  %1387 = vmatprep.subr.bf16.mxu0 0
  %1388 = vmatpush2.bf16.msra.mxu0 0
  %1389 = vmatprep.subr.bf16.mxu0 0
  %1390 = vmatpush2.bf16.msra.mxu0 0
  %1391 = vmatprep.subr.bf16.mxu0 0
  %1392 = vmatpush2.bf16.msra.mxu0 0
  %1393 = vmatprep.subr.bf16.mxu0 0
  %1394 = vmatpush2.bf16.msra.mxu0 0
  %1395 = vmatprep.subr.bf16.mxu0 0
  %1396 = vmatpush2.bf16.msra.mxu0 0
  %1397 = vmatprep.subr.bf16.mxu0 0
  %1398 = vmatpush2.bf16.msra.mxu0 0
  %1399 = vmatprep.subr.bf16.mxu0 0
  %1400 = vmatpush2.bf16.msra.mxu0 0
  %1401 = vmatprep.subr.bf16.mxu0 0
  %1402 = vmatpush2.bf16.msra.mxu0 0
  %1403 = vmatprep.mubr.bf16.mxu0 0
  %1404 = vmatmul.mubr.bf16.gmra.mxu0 %v1207
  %v1405 = vpop.f32.mrf.mxu0
  %v1406 = vadd.f32 0.0, %v1405
  %v1407 = vpop.f32.mrf.mxu0
  %v1408 = vpop.f32.mrf.mxu0
  %v1409 = vadd.f32 0.0, %v1408
  %v1410 = vpop.f32.mrf.mxu0
  %1411 = vmatprep.mubr.bf16.mxu0 0
  %1412 = vmatmul.mubr.bf16.gmra.mxu0 %v1208
  %v1413 = vpop.f32.mrf.mxu0
  %v1414 = vadd.f32 0.0, %v1413
  %v1415 = vpop.f32.mrf.mxu0
  %v1416 = vpop.f32.mrf.mxu0
  %v1417 = vadd.f32 0.0, %v1416
  %v1418 = vpop.f32.mrf.mxu0
  %1419 = vdwg.mxu0
  %v1420 = vmax.f32 %v1292, %v1406
  %v1421 = vmax.f32 %v1295, %v1409
  %v1422 = vmax.f32 %v1300, %v1414
  %v1423 = vmax.f32 %v1303, %v1417
  %v1424 = vld [vmem:[%s5] sm:$0xf]
  %v1425 = vld [vmem:[%s5 + $0x4] sm:$0xf]
  %v1426 = vld [vmem:[%s5 + $0x8] sm:$0xf]
  %v1427 = vld [vmem:[%s5 + $0xc] sm:$0xf]
  %v1428 = vld [vmem:[%s5 + $0x10] sm:$0xf]
  %v1429 = vld [vmem:[%s5 + $0x14] sm:$0xf]
  %v1430 = vld [vmem:[%s5 + $0x18] sm:$0xf]
  %v1431 = vld [vmem:[%s5 + $0x1c] sm:$0xf]
  %v1432 = vpack.c.bf16 %v1421, %v1420
  %v1433 = vpack.c.bf16 %v1423, %v1422
  %v1442 = vunpack.c.l.b16 %v1424
  %v1443 = vunpack.c.l.b16 %v1425
  %v1444 = vunpack.c.l.b16 %v1426
  %v1445 = vunpack.c.l.b16 %v1427
  %v1446 = vunpack.c.l.b16 %v1428
  %v1447 = vunpack.c.l.b16 %v1429
  %v1448 = vunpack.c.l.b16 %v1430
  %v1449 = vunpack.c.l.b16 %v1431
  %v1450 = vpack.c.b16 %v1443, %v1442
  %v1451 = vpack.c.b16 %v1445, %v1444
  %v1452 = vpack.c.b16 %v1447, %v1446
  %v1453 = vpack.c.b16 %v1449, %v1448
  %v1459 = vsel %vm878, %v1432, 0
  %v1462 = vsel %vm878, %v1433, 0
  %1464 = vmatprep.subr.bf16.mxu0 0
  %1465 = vmatpush1.bf16.msra.mxu0 0
  %1466 = vmatprep.subr.bf16.mxu0 0
  %1467 = vmatpush1.bf16.msra.mxu0 0
  %1468 = vmatprep.subr.bf16.mxu0 0
  %1469 = vmatpush1.bf16.msra.mxu0 0
  %1470 = vmatprep.subr.bf16.mxu0 0
  %1471 = vmatpush1.bf16.msra.mxu0 0
  %1472 = vmatprep.subr.bf16.mxu0 0
  %1473 = vmatpush1.bf16.msra.mxu0 %v1453
  %1474 = vmatprep.subr.bf16.mxu0 0
  %1475 = vmatpush1.bf16.msra.mxu0 %v1452
  %1476 = vmatprep.subr.bf16.mxu0 0
  %1477 = vmatpush1.bf16.msra.mxu0 %v1451
  %1478 = vmatprep.subr.bf16.mxu0 0
  %1479 = vmatpush1.bf16.msra.mxu0 %v1450
  %1480 = vmatprep.subr.bf16.mxu0 0
  %1481 = vmatpush2.bf16.msra.mxu0 0
  %1482 = vmatprep.subr.bf16.mxu0 0
  %1483 = vmatpush2.bf16.msra.mxu0 0
  %1484 = vmatprep.subr.bf16.mxu0 0
  %1485 = vmatpush2.bf16.msra.mxu0 0
  %1486 = vmatprep.subr.bf16.mxu0 0
  %1487 = vmatpush2.bf16.msra.mxu0 0
  %1488 = vmatprep.subr.bf16.mxu0 0
  %1489 = vmatpush2.bf16.msra.mxu0 0
  %1490 = vmatprep.subr.bf16.mxu0 0
  %1491 = vmatpush2.bf16.msra.mxu0 0
  %1492 = vmatprep.subr.bf16.mxu0 0
  %1493 = vmatpush2.bf16.msra.mxu0 0
  %1494 = vmatprep.subr.bf16.mxu0 0
  %1495 = vmatpush2.bf16.msra.mxu0 0
  %1496 = vmatprep.mubr.bf16.mxu0 0
  %1497 = vmatmul.mubr.bf16.gmra.mxu0 %v1459
  %v1498 = vpop.f32.mrf.mxu0
  %v1499 = vadd.f32 0.0, %v1498
  %v1500 = vpop.f32.mrf.mxu0
  %v1501 = vpop.f32.mrf.mxu0
  %v1502 = vadd.f32 0.0, %v1501
  %v1503 = vpop.f32.mrf.mxu0
  %1504 = vmatprep.mubr.bf16.mxu0 0
  %1505 = vmatmul.mubr.bf16.gmra.mxu0 %v1462
  %v1506 = vpop.f32.mrf.mxu0
  %v1507 = vadd.f32 0.0, %v1506
  %v1508 = vpop.f32.mrf.mxu0
  %v1509 = vpop.f32.mrf.mxu0
  %v1510 = vadd.f32 0.0, %v1509
  %v1511 = vpop.f32.mrf.mxu0
  %1512 = vdwg.mxu0
  %v1513 = vld [vmem:[%s6] sm:$0x1]
  %v1515 = vlaneseq
  %v1516 = vshrl.u32 %v1515, 7
  %v1517 = vsub.s32 0, %v1516
  %v1518 = vrot.slane %v1513, %v1517
  %v1520 = vadd.f32 %v1518, %v1499
  %1522 = vrot.lane.b32.xlu0 %v1502, 96
  %v1523 = vpop.permute.xlu0 %1522
  %v1525 = vadd.f32 %v1520, %v1523
  %1527 = vrot.lane.b32.xlu0 %v1507, 64
  %v1528 = vpop.permute.xlu0 %1527
  %v1530 = vadd.f32 %v1525, %v1528
  %1532 = vrot.lane.b32.xlu0 %v1510, 32
  %v1533 = vpop.permute.xlu0 %1532
  %v1535 = vadd.f32 %v1530, %v1533
  %vm1536 = vcmask 261120
  %1537 = vst.msk [vmem:[%s9] sm:$0xff] %vm1536, %v1535
  // Predicated region
  $region38: #{triplet_forward.1} parent=0 // pred_check
    _
  $region39: #{triplet_forward.1} parent=0 // pred_check_branch
    %1539 = sbr.rel (0) target = $region41
  $region40: #{triplet_forward.1} parent=0 // pred_region
    _
  $region41: #{triplet_forward.1} parent=0 // pred_fallthru
    _
  // Predicated region
  $region42: #{triplet_forward.1} parent=0 // pred_check
    _
  $region43: #{triplet_forward.1} parent=0 // pred_check_branch
    %1541 = sbr.rel (0) target = $region45
  $region44: #{triplet_forward.1} parent=0 // pred_region
    _
  $region45: #{triplet_forward.1} parent=0 // pred_fallthru
    _

</llo_original>
